<compile_context>
chip_gen: v6e
topology: v6e:2x2x1
jax: 0.10.0
libtpu: 0.0.40
codegen_flags: <defaults>
</compile_context>

<pallas_src>
import functools

import jax
import jax.numpy as jnp
import numpy as np
from jax.experimental import pallas as pl
from jax.experimental.pallas import tpu as pltpu

H = 768          # hidden size hard-coded in the torch module
GATES = 4 * H    # PyTorch LSTM gate order: i, f, g, o
VOCAB = 128


def _round_up(x, m):
    return (x + m - 1) // m * m


def _pick_tile(dim, candidates):
    """Largest candidate that divides dim; fall back to the full dim."""
    for c in candidates:
        if dim >= c and dim % c == 0:
            return c
    return dim


# -----------------------------------------------------------------------------
# Kernel 1: tiled  y = x @ W + b  -- bf16 MXU operands, f32 accumulation.
# K = 768 in this module, so a single K slab per tile: no K grid axis, no acc scratch.
# -----------------------------------------------------------------------------
def _mm_kernel(x_ref, w_ref, b_ref, o_ref):
    y = jnp.dot(x_ref[...], w_ref[...],
                preferred_element_type=jnp.float32) + b_ref[...]
    o_ref[...] = y.astype(o_ref.dtype)


def matmul_bias(x, w, b, *, out_dtype=jnp.float32):
    M, K = x.shape
    K2, N = w.shape
    assert K == K2
    assert K % 128 == 0 and K <= 2048            # single K slab (K = 768 here)
    # keep 128-row MXU tiles / megacore sharding alive instead of one giant M tile
    M_pad = _round_up(M, 128) if M > 128 else _round_up(M, 8)
    if M_pad != M:
        x = jnp.pad(x, ((0, M_pad - M), (0, 0)))
    tm = _pick_tile(M_pad, (512, 256, 128))
    tn = _pick_tile(N, (512, 384, 256, 128))
    xb = x.astype(jnp.bfloat16)
    wb = w.astype(jnp.bfloat16)
    bf = b.reshape(1, N).astype(jnp.float32)
    out = pl.pallas_call(
        _mm_kernel,
        out_shape=jax.ShapeDtypeStruct((M_pad, N), out_dtype),
        grid_spec=pltpu.PrefetchScalarGridSpec(
            num_scalar_prefetch=0,
            grid=(M_pad // tm, N // tn),
            in_specs=[pl.BlockSpec((tm, K), lambda i, j: (i, 0)),
                      pl.BlockSpec((K, tn), lambda i, j: (0, j)),
                      pl.BlockSpec((1, tn), lambda i, j: (0, j))],
            out_specs=pl.BlockSpec((tm, tn), lambda i, j: (i, j))),
        compiler_params=pltpu.CompilerParams(
            dimension_semantics=("parallel", "parallel")),
    )(xb, wb, bf)
    return out[:M] if M_pad != M else out


# -----------------------------------------------------------------------------
# Kernel 2: forward-direction LSTM recurrence -> last hidden state.
# gx[t] = x_t @ W_ih + (b_ih + b_hh) is precomputed (bias folded in) and streamed in
# bf16, T_blk timesteps per grid step; only the recurrent h @ W_hh matmul runs per step.
# W_hh is bf16 and VMEM-resident; h/c persist in f32 scratch; gate math is f32.
# Leading grid axis splits batch rows across v7x's two TensorCores when 2B >= 16.
# -----------------------------------------------------------------------------
def _lstm_last_kernel(gx_ref, whh_ref, o_ref, h_ref, c_ref, *, t_blk):
    t = pl.program_id(1)

    @pl.when(t == 0)
    def _():
        h_ref[...] = jnp.zeros_like(h_ref)
        c_ref[...] = jnp.zeros_like(c_ref)

    # t_blk timesteps per grid step amortize per-grid-step overhead; the static Python
    # loop is fully unrolled (t_blk <= 8), equivalent to lax.fori_loop(..., unroll=True).
    for tl in range(t_blk):
        gates = gx_ref[tl].astype(jnp.float32) + jnp.dot(
            h_ref[...].astype(jnp.bfloat16), whh_ref[...],
            preferred_element_type=jnp.float32)
        i = jax.nn.sigmoid(gates[:, 0 * H:1 * H])
        f = jax.nn.sigmoid(gates[:, 1 * H:2 * H])
        g = jnp.tanh(gates[:, 2 * H:3 * H])
        o = jax.nn.sigmoid(gates[:, 3 * H:4 * H])
        c_ref[...] = f * c_ref[...] + i * g
        h_ref[...] = o * jnp.tanh(c_ref[...])

    @pl.when(t == pl.num_programs(1) - 1)
    def _():
        o_ref[...] = h_ref[...]


def lstm_last(gx, whh_bf16):
    # gx: [S, 2B, 4H] bf16   whh_bf16: [H, 4H] bf16   ->   h_T : [2B, H] f32
    S, nrows, G = gx.shape
    # largest timestep block dividing S with a streamed gx block <= ~2 MiB, so
    # double-buffered gx + bf16 W_hh stay inside v5e's 16 MiB default scoped VMEM.
    t_blk = 1
    for cand in (8, 4, 2):
        if S % cand == 0 and cand * nrows * G * gx.dtype.itemsize <= 2 * 1024 * 1024:
            t_blk = cand
            break
    # v7x megacore: independent batch rows split across the two TCs when big enough
    # (skip at tiny batch where it only duplicates W_hh).
    r_blocks = 2 if (nrows >= 16 and nrows % 16 == 0) else 1
    row_blk = nrows // r_blocks
    return pl.pallas_call(
        functools.partial(_lstm_last_kernel, t_blk=t_blk),
        out_shape=jax.ShapeDtypeStruct((nrows, H), jnp.float32),
        grid_spec=pltpu.PrefetchScalarGridSpec(
            num_scalar_prefetch=0,
            grid=(r_blocks, S // t_blk),
            in_specs=[pl.BlockSpec((t_blk, row_blk, G), lambda r, t: (t, r, 0)),
                      pl.BlockSpec((H, G), lambda r, t: (0, 0))],
            out_specs=pl.BlockSpec((row_blk, H), lambda r, t: (r, 0)),
            scratch_shapes=[pltpu.VMEM((row_blk, H), jnp.float32),
                            pltpu.VMEM((row_blk, H), jnp.float32)]),
        compiler_params=pltpu.CompilerParams(
            dimension_semantics=("parallel", "arbitrary")),
    )(gx, whh_bf16)


# -----------------------------------------------------------------------------
# Kernel 3 (fused tail, grid-less => single-buffered VMEM-resident weights):
#   reverse-direction gate matmul + single cell step, matching head, full MLP.
# For a bidirectional LSTM, output[:, -1, H:] is the reverse direction after processing
# ONLY the last token from h0=c0=0, so f*c0 == 0 and the reverse W_hh drops out.
# con/sen arrive as a leading [2, B, ...] axis -> no sublane-unaligned row splits.
# The 128->1 layer is padded to 128->128 for a lane-dense store (column 0 = answer).
# -----------------------------------------------------------------------------
def _tail_kernel(hf_ref, xl_ref, wb_ref, bb_ref, w0_ref, b0_ref,
                 w1_ref, b1_ref, w2_ref, b2_ref, w3_ref, b3_ref, o_ref):
    def rev_h(x):  # one reverse cell step from zero state -> [B, H]
        gb = jnp.dot(x.astype(jnp.bfloat16), wb_ref[...],
                     preferred_element_type=jnp.float32) + bb_ref[...]
        i = jax.nn.sigmoid(gb[:, 0 * H:1 * H])
        g = jnp.tanh(gb[:, 2 * H:3 * H])
        o = jax.nn.sigmoid(gb[:, 3 * H:4 * H])
        return o * jnp.tanh(i * g)

    h_con = jnp.concatenate([hf_ref[0], rev_h(xl_ref[0])], axis=-1)   # [B, 2H]
    h_sen = jnp.concatenate([hf_ref[1], rev_h(xl_ref[1])], axis=-1)   # [B, 2H]
    h_cat = jnp.concatenate([jnp.abs(h_sen - h_con), h_sen * h_con], axis=-1)  # [B, 4H]

    def dense(x, w_ref, b_ref, act):
        y = jnp.dot(x.astype(jnp.bfloat16), w_ref[...],
                    preferred_element_type=jnp.float32) + b_ref[...]
        return jnp.where(y >= 0, y, 0.01 * y) if act else y   # nn.LeakyReLU default

    y = dense(h_cat, w0_ref, b0_ref, True)
    y = dense(y, w1_ref, b1_ref, True)
    y = dense(y, w2_ref, b2_ref, True)
    o_ref[...] = dense(y, w3_ref, b3_ref, False)               # [B, 128]; col 0 = result


def fused_tail(hf, xl, params):
    # hf, xl: [2, B, H] f32 (index 0 = concept rows, index 1 = sentence rows)
    B = hf.shape[1]
    wb = params["w_ih_b"].astype(jnp.bfloat16)
    bb = params["b_b"].reshape(1, GATES).astype(jnp.float32)
    w0 = params["W0"].astype(jnp.bfloat16)
    w1 = params["W1"].astype(jnp.bfloat16)
    w2 = params["W2"].astype(jnp.bfloat16)
    # pad the final 128 -> 1 projection to a lane-dense 128 -> 128 (extra cols are zero)
    w3 = jnp.zeros((128, 128), jnp.float32).at[:, 0].set(params["W3"][:, 0])
    w3 = w3.astype(jnp.bfloat16)
    b3 = jnp.zeros((1, 128), jnp.float32).at[0, 0].set(params["bl3"][0])
    b0 = params["bl0"].reshape(1, -1).astype(jnp.float32)
    b1 = params["bl1"].reshape(1, -1).astype(jnp.float32)
    b2 = params["bl2"].reshape(1, -1).astype(jnp.float32)

    out = pl.pallas_call(
        _tail_kernel,
        out_shape=jax.ShapeDtypeStruct((B, 128), jnp.float32),
        # grid-less call: every operand is a single-buffered full-array VMEM ref
        # (~16 MiB of bf16 weights); 40 MiB scoped limit leaves headroom on all gens.
        compiler_params=pltpu.CompilerParams(vmem_limit_bytes=40 * 1024 * 1024),
    )(hf, xl, wb, bb, w0, b0, w1, b1, w2, b2, w3, b3)
    return out[:, :1]                                          # real answer is column 0


# -----------------------------------------------------------------------------
# Parameters (deterministic, in-script) and the full forward pass
# -----------------------------------------------------------------------------
def init_params(key):
    ks = jax.random.split(key, 16)
    u = lambda k, shape, s: jax.random.uniform(k, shape, jnp.float32, -s, s)
    sl = 1.0 / np.sqrt(H)
    p = {}
    # shared bidirectional LSTM (same module applied to sentence & concept)
    p["w_ih_f"] = u(ks[0], (H, GATES), sl)
    p["w_hh_f"] = u(ks[1], (H, GATES), sl)
    p["b_f"] = u(ks[2], (GATES,), sl)          # b_ih + b_hh merged
    p["w_ih_b"] = u(ks[3], (H, GATES), sl)
    p["b_b"] = u(ks[4], (GATES,), sl)
    # reverse-direction w_hh is mathematically unused (one step from zero state)
    # MLP: 3072 -> 1536 -> 768 -> 128 -> 1
    dims = [4 * H, 2 * H, H, 128, 1]
    for li in range(4):
        fi, fo = dims[li], dims[li + 1]
        s = 1.0 / np.sqrt(fi)
        p[f"W{li}"] = u(ks[5 + 2 * li], (fi, fo), s)
        p[f"bl{li}"] = u(ks[6 + 2 * li], (fo,), s)
    # stand-in for BERT: deterministic token-embedding table
    p["emb"] = 0.02 * jax.random.normal(ks[14], (VOCAB, H), jnp.float32)
    return p


def ft_match_forward(params, x):
    sen_ids, _sen_mask, con_ids, _con_mask = x
    B, S = sen_ids.shape
    # TODO(synk): the pretrained 'bert-base-chinese' encoder has no in-script Pallas
    # equivalent; it is replaced by a deterministic embedding lookup (masks unused —
    # the torch nn.LSTM also ignores them, taking output[:, -1, :] at the last index).
    ids = jnp.concatenate([con_ids, sen_ids], axis=0)              # [2B, S] shared LSTM
    n2 = 2 * B
    # gather directly into time-major layout: gx is produced in [S, 2B, 4H] with no HBM
    # transpose of the wide gate tensor
    stacked_t = jnp.take(params["emb"], ids.T, axis=0)             # [S, 2B, H]

    # forward direction: gx = x @ W_ih + b for all steps (bf16), then streamed recurrence
    gx = matmul_bias(stacked_t.reshape(S * n2, H), params["w_ih_f"], params["b_f"],
                     out_dtype=jnp.bfloat16)
    gx = gx.reshape(S, n2, GATES)                                  # [S, 2B, 4H]
    h_fwd = lstm_last(gx, params["w_hh_f"].astype(jnp.bfloat16))   # [2B, H] f32

    # reverse direction at the last position == one cell step on the final token; its
    # gate matmul is fused into the tail kernel together with the matching head + MLP.
    x_last = stacked_t[-1]                                         # [2B, H]
    hf = h_fwd.reshape(2, B, H)                                    # [con ; sen]
    xl = x_last.reshape(2, B, H)
    return fused_tail(hf, xl, params)                              # [B, 1]


# Plain-JAX f32 reference (mirrors PyTorch semantics) for a correctness check.
def ft_match_reference(params, x):
    sen_ids, _m1, con_ids, _m2 = x
    B, _ = sen_ids.shape
    sen_emb = jnp.take(params["emb"], sen_ids, axis=0)
    con_emb = jnp.take(params["emb"], con_ids, axis=0)
    stacked = jnp.concatenate([con_emb, sen_emb], axis=0)

    def lstm_dir_last(xs, w_ih, w_hh, b):
        h = jnp.zeros((xs.shape[0], H), jnp.float32)
        c = jnp.zeros((xs.shape[0], H), jnp.float32)
        for t in range(xs.shape[1]):
            g = xs[:, t, :] @ w_ih + h @ w_hh + b
            i = jax.nn.sigmoid(g[:, :H])
            f = jax.nn.sigmoid(g[:, H:2 * H])
            gg = jnp.tanh(g[:, 2 * H:3 * H])
            o = jax.nn.sigmoid(g[:, 3 * H:])
            c = f * c + i * gg
            h = o * jnp.tanh(c)
        return h

    h_fwd = lstm_dir_last(stacked, params["w_ih_f"], params["w_hh_f"], params["b_f"])
    h_bwd = lstm_dir_last(stacked[:, -1:, :], params["w_ih_b"],
                          jnp.zeros((H, GATES), jnp.float32), params["b_b"])
    h_last = jnp.concatenate([h_fwd, h_bwd], axis=-1)
    h_con, h_sen = h_last[:B], h_last[B:]
    h_cat = jnp.concatenate([jnp.abs(h_sen - h_con), h_sen * h_con], axis=-1)

    lrelu = lambda v: jnp.where(v >= 0, v, 0.01 * v)
    y = lrelu(h_cat @ params["W0"] + params["bl0"])
    y = lrelu(y @ params["W1"] + params["bl1"])
    y = lrelu(y @ params["W2"] + params["bl2"])
    return y @ params["W3"] + params["bl3"]


if __name__ == "__main__":
    key = jax.random.PRNGKey(0)
    kp, k1, k2 = jax.random.split(key, 3)
    params = init_params(kp)

    B, S = 2, 8
    sen_ids = jax.random.randint(k1, (B, S), 0, VOCAB, dtype=jnp.int32)
    con_ids = jax.random.randint(k2, (B, S), 0, VOCAB, dtype=jnp.int32)
    sen_mask = jnp.ones((B, S), jnp.int32)
    con_mask = jnp.ones((B, S), jnp.int32)
    x = (sen_ids, sen_mask, con_ids, con_mask)

    out = jax.block_until_ready(ft_match_forward(params, x))
    ref = jax.block_until_ready(ft_match_reference(params, x))
    assert out.shape == (B, 1)
    # kernels use bf16 MXU operands / bf16-streamed gx with f32 accumulation & gate math;
    # tolerance sized accordingly
    np.testing.assert_allclose(np.asarray(out), np.asarray(ref), rtol=2e-2, atol=5e-3)
    print("KERNEL_OK")
</pallas_src>

<mosaic_0001>
module attributes {stable_mosaic.version = 11 : i64} {
  func.func @_mm_kernel(%arg0: i32, %arg1: i32, %arg2: memref<32x768xbf16, #tpu.memory_space<vmem>>, %arg3: memref<768x512xbf16, #tpu.memory_space<vmem>>, %arg4: memref<1x512xf32, #tpu.memory_space<vmem>>, %arg5: memref<32x512xbf16, #tpu.memory_space<vmem>>) attributes {dimension_semantics = [#tpu.dimension_semantics<parallel>, #tpu.dimension_semantics<parallel>], iteration_bounds = array<i64: 1, 6>, scalar_prefetch = 0 : i64, scratch_operands = 0 : i64, tpu.core_type = #tpu.core_type<tc>, window_params = [{transform_indices = @transform_0, window_bounds = array<i64: 32, 768>}, {transform_indices = @transform_1, window_bounds = array<i64: 768, 512>}, {transform_indices = @transform_2, window_bounds = array<i64: 1, 512>}, {transform_indices = @transform_3, window_bounds = array<i64: 32, 512>}]} {
    %c0 = arith.constant 0 : index
    %c0_0 = arith.constant 0 : index
    %0 = vector.load %arg2[%c0, %c0_0] : memref<32x768xbf16, #tpu.memory_space<vmem>>, vector<32x768xbf16>
    %c0_1 = arith.constant 0 : index
    %c0_2 = arith.constant 0 : index
    %1 = vector.load %arg3[%c0_1, %c0_2] : memref<768x512xbf16, #tpu.memory_space<vmem>>, vector<768x512xbf16>
    %cst = arith.constant dense<0.000000e+00> : vector<32x512xf32>
    %2 = tpu.matmul %0, %1, %cst {dimension_numbers = #tpu.dot_dimension_numbers<[1], [0], [0], [1], [0, 0, 1, 1], [], []>} : vector<32x768xbf16>, vector<768x512xbf16>, vector<32x512xf32> -> vector<32x512xf32>
    %c0_3 = arith.constant 0 : index
    %c0_4 = arith.constant 0 : index
    %3 = vector.load %arg4[%c0_3, %c0_4] : memref<1x512xf32, #tpu.memory_space<vmem>>, vector<1x512xf32>
    %4 = vector.broadcast %3 : vector<1x512xf32> to vector<32x512xf32>
    %5 = arith.addf %2, %4 : vector<32x512xf32>
    %6 = arith.truncf %5 : vector<32x512xf32> to vector<32x512xbf16>
    %c0_5 = arith.constant 0 : index
    %c0_6 = arith.constant 0 : index
    %7 = vector.load %arg5[%c0_5, %c0_6] : memref<32x512xbf16, #tpu.memory_space<vmem>>, vector<32x512xbf16>
    tpu.vector_store %arg5[%c0_5, %c0_6], %6 {strides = array<i32>} : memref<32x512xbf16, #tpu.memory_space<vmem>>, vector<32x512xbf16>,
    return
  }
  func.func @transform_0(%arg0: i32, %arg1: i32) -> (i32, i32) {
    %c0_i32 = arith.constant 0 : i32
    %c0_i32_0 = arith.constant 0 : i32
    return %arg0, %c0_i32 : i32, i32
  }
  func.func @transform_1(%arg0: i32, %arg1: i32) -> (i32, i32) {
    %c0_i32 = arith.constant 0 : i32
    %c0_i32_0 = arith.constant 0 : i32
    return %c0_i32, %arg1 : i32, i32
  }
  func.func @transform_2(%arg0: i32, %arg1: i32) -> (i32, i32) {
    %c0_i32 = arith.constant 0 : i32
    %c0_i32_0 = arith.constant 0 : i32
    return %c0_i32, %arg1 : i32, i32
  }
  func.func @transform_3(%arg0: i32, %arg1: i32) -> (i32, i32) {
    %c0_i32 = arith.constant 0 : i32
    return %arg0, %arg1 : i32, i32
  }
}

</mosaic_0001>

<llo_original>
// kernel: tpu_custom_call.1
$region0: #{tpu_custom_call.1}
  #allocation0 [shape = 'u32[]', space=smem, size = 0x4, offset = 0x4, fixed_abs, tag = 'smem constant byte address 0x4 - core index']
  #allocation1 [shape = 'u32[144,128]{1,0:T(1,128)}', space=vmem, size = 0x12000, scoped, tag = 'internal scratch']
  %s0 = inlined_call_operand.hbm [shape: bf16[32,768], index: 0, kind: input, shape index: {}]
  %s1 = inlined_call_operand.hbm [shape: bf16[768,3072], index: 1, kind: input, shape index: {}]
  %s2 = inlined_call_operand.hbm [shape: f32[1,3072], index: 2, kind: input, shape index: {}]
  %s3 = inlined_call_operand.hbm [shape: bf16[32,3072], index: 3, kind: output, shape index: {}]
  %s4 = sld [smem:[#allocation0]]
  $region57: #{tpu_custom_call.1} parent=0
    _
  %s6 = ssub.s32 1, %s4
  %s7 = scalar_select 0, %s6, %s4
  $region1: #{tpu_custom_call.1} parent=0
    #allocation2 [shape = 'u8[49152]{0}', space=vmem, size = 0xc000, scoped, tag = 'input window, operand 0, single buffered']
    #allocation3 [shape = 's32[2]{0}', space=sflag, size = 0x8, scoped, tag = 'scoped memory for tpu_custom_call.1']
    #allocation4 [shape = 's32[2]{0}', space=sflag, size = 0x8, scoped, tag = 'scoped memory for tpu_custom_call.1']
    #allocation5 [shape = 'u8[1572864]{0}', space=vmem, size = 0x180000, scoped, tag = 'input window, operand 1']
    #allocation6 [shape = 's32[2]{0}', space=sflag, size = 0x8, scoped, tag = 'scoped memory for tpu_custom_call.1']
    #allocation7 [shape = 'u8[4096]{0}', space=vmem, size = 0x1000, scoped, tag = 'input window, operand 2']
    #allocation8 [shape = 'u8[65536]{0}', space=vmem, size = 0x10000, scoped, tag = 'output window, operand 0']
    %8 = vsyncpa [#allocation3], 0
    %9 = vsyncpa [#allocation6], 0
    %s10 = scalar_lea.sflag [#allocation6], 1
    %11 = vsyncpa %s10, 0
    %12 = vsyncpa [#allocation4], 0
    %s13 = scalar_lea.sflag [#allocation4], 1
    %14 = vsyncpa %s13, 0
    loop: start=0, step=1, limit=8
    $region2: #{tpu_custom_call.1} parent=1 // loop_pre_header
      _
    $region3: #{tpu_custom_call.1} parent=1 // loop_header
      %s16 = sphi 0, %s20
      %p17 = scmp.ge.s32.totalorder %s16, 8
      %s23 = sphi 0, %s35
      %s24 = sphi 0, %s31
      %s25 = sphi 0, %s23
      %s26 = sphi 0, %s24
      %s27 = sphi 0, %s25
      %s28 = sphi 0, %s26
      %s38 = sphi 0, %s40
      %s41 = sphi 0, %s38
      %s42 = sphi 0, %s41
      %s58 = sphi 0, %s42
      %s64 = sphi 0, %s66
      %s67 = sphi 0, %s64
      %s68 = sphi 0, %s67
      %s84 = sphi 0, %s68
      %s90 = sphi 0, %s92
      %s93 = sphi 0, %s90
      %s94 = sphi 0, %s93
      %s110 = sphi 0, %s94
      %s118 = sphi 0, %s120
      %s121 = sphi 0, %s118
      %s122 = sphi 0, %s121
      %s138 = sphi 0, %s122
    $region4: #{tpu_custom_call.1} parent=1 // loop_header_branch
      %19 = sbr.rel (%p17) target = $region8
    $region5: #{tpu_custom_call.1} parent=1 // loop_body
      %s21 = ssub.s32 %s16, 1
      %s22 = ssub.s32 %s16, 2
      %s29 = sadd.s32 1, %s24
      %p30 = scmp.ge.s32.totalorder %s29, 6
      %s31 = scalar_select %p30, 0, %s29
      %s32 = sadd.s32 1, %s23
      %s33 = scalar_select %p30, %s32, %s23
      %p34 = scmp.ge.s32.totalorder %s33, 1
      %s35 = scalar_select %p34, 0, %s33
      %s36 = ssub.s32 %s23, %s35
      %p37 = scmp.eq.s32.totalorder %s36, 0
      %s39 = sadd.s32 %s38, 1
      %s40 = scalar_select %p37, %s38, %s39
      %p43 = pneg %p37
      %p44 = scmp.eq.s32.totalorder %s16, 5
      %p45 = por %p43, %p44
      %p46 = scmp.ne.s32.totalorder %s38, %s41
      %p47 = scmp.eq.s32.totalorder %s16, 0
      %p48 = por %p46, %p47
      %p49 = scmp.ne.s32.totalorder %s38, %s41
      %p50 = scmp.eq.s32.totalorder %s21, 5
      %p51 = por %p49, %p50
      %p52 = scmp.ne.s32.totalorder %s41, %s42
      %p53 = scmp.eq.s32.totalorder %s21, 0
      %p54 = por %p52, %p53
      %p55 = scmp.ne.s32.totalorder %s41, %s42
      %p56 = scmp.eq.s32.totalorder %s22, 5
      %p57 = por %p55, %p56
      %p59 = scmp.ne.s32.totalorder %s42, %s58
      %p60 = scmp.eq.s32.totalorder %s22, 0
      %p61 = por %p59, %p60
      %s62 = ssub.s32 %s24, %s31
      %p63 = scmp.eq.s32.totalorder %s62, 0
      %s65 = sadd.s32 %s64, 1
      %s66 = scalar_select %p63, %s64, %s65
      %p69 = pneg %p63
      %p70 = scmp.eq.s32.totalorder %s16, 5
      %p71 = por %p69, %p70
      %p72 = scmp.ne.s32.totalorder %s64, %s67
      %p73 = scmp.eq.s32.totalorder %s16, 0
      %p74 = por %p72, %p73
      %p75 = scmp.ne.s32.totalorder %s64, %s67
      %p76 = scmp.eq.s32.totalorder %s21, 5
      %p77 = por %p75, %p76
      %p78 = scmp.ne.s32.totalorder %s67, %s68
      %p79 = scmp.eq.s32.totalorder %s21, 0
      %p80 = por %p78, %p79
      %p81 = scmp.ne.s32.totalorder %s67, %s68
      %p82 = scmp.eq.s32.totalorder %s22, 5
      %p83 = por %p81, %p82
      %p85 = scmp.ne.s32.totalorder %s68, %s84
      %p86 = scmp.eq.s32.totalorder %s22, 0
      %p87 = por %p85, %p86
      %s88 = ssub.s32 %s24, %s31
      %p89 = scmp.eq.s32.totalorder %s88, 0
      %s91 = sadd.s32 %s90, 1
      %s92 = scalar_select %p89, %s90, %s91
      %p95 = pneg %p89
      %p96 = scmp.eq.s32.totalorder %s16, 5
      %p97 = por %p95, %p96
      %p98 = scmp.ne.s32.totalorder %s90, %s93
      %p99 = scmp.eq.s32.totalorder %s16, 0
      %p100 = por %p98, %p99
      %p101 = scmp.ne.s32.totalorder %s90, %s93
      %p102 = scmp.eq.s32.totalorder %s21, 5
      %p103 = por %p101, %p102
      %p104 = scmp.ne.s32.totalorder %s93, %s94
      %p105 = scmp.eq.s32.totalorder %s21, 0
      %p106 = por %p104, %p105
      %p107 = scmp.ne.s32.totalorder %s93, %s94
      %p108 = scmp.eq.s32.totalorder %s22, 5
      %p109 = por %p107, %p108
      %p111 = scmp.ne.s32.totalorder %s94, %s110
      %p112 = scmp.eq.s32.totalorder %s22, 0
      %p113 = por %p111, %p112
      %s114 = ssub.s32 %s23, %s35
      %s115 = ssub.s32 %s24, %s31
      %s116 = sor.u32 %s114, %s115
      %p117 = scmp.eq.s32.totalorder %s116, 0
      %s119 = sadd.s32 %s118, 1
      %s120 = scalar_select %p117, %s118, %s119
      %p123 = pneg %p117
      %p124 = scmp.eq.s32.totalorder %s16, 5
      %p125 = por %p123, %p124
      %p126 = scmp.ne.s32.totalorder %s118, %s121
      %p127 = scmp.eq.s32.totalorder %s16, 0
      %p128 = por %p126, %p127
      %p129 = scmp.ne.s32.totalorder %s118, %s121
      %p130 = scmp.eq.s32.totalorder %s21, 5
      %p131 = por %p129, %p130
      %p132 = scmp.ne.s32.totalorder %s121, %s122
      %p133 = scmp.eq.s32.totalorder %s21, 0
      %p134 = por %p132, %p133
      %p135 = scmp.ne.s32.totalorder %s121, %s122
      %p136 = scmp.eq.s32.totalorder %s22, 5
      %p137 = por %p135, %p136
      %p139 = scmp.ne.s32.totalorder %s122, %s138
      %p140 = scmp.eq.s32.totalorder %s22, 0
      %p141 = por %p139, %p140
      %p142 = scmp.le.s32.totalorder 1, %s16
      %p143 = scmp.lt.s32.totalorder %s16, 7
      %p144 = pnand %p142, %p143
      %p145 = pneg %p144
      // Predicated region
      $region9: #{tpu_custom_call.1} parent=5 // pred_check
        _
      $region10: #{tpu_custom_call.1} parent=5 // pred_check_branch
        %147 = sbr.rel (%p144) target = $region12
      $region11: #{tpu_custom_call.1} parent=5 // pred_region
        %s148 = ssub.s32 %s16, 1
        // Predicated region
        $region13: #{tpu_custom_call.1} parent=11 // pred_check
          %p149 = pneg %p54
        $region14: #{tpu_custom_call.1} parent=11 // pred_check_branch
          %151 = sbr.rel (%p149) target = $region16
        $region15: #{tpu_custom_call.1} parent=11 // pred_region
          %s152 = smul.u32 4, %s25
          %s154 = ssub.s32 1536, 1536
          %155 = vsyncadd [#allocation3], %s154
          %s156 = smul.addr %s152, 6
          %s157 = smul.addr %s156, 64
          %s158 = scalar_lea.hbm %s0, %s157
          %s159 = sshll.u32 [#allocation2], 4
          %s160 = int_to_ptr.vmem [resolvable:$true] %s159
          %165 = dma.hbm_to_vmem [thread:$0]  %s158, 1536, %s160, [#allocation3], 384, 384, 24
        $region16: #{tpu_custom_call.1} parent=11 // pred_fallthru
          _
      $region12: #{tpu_custom_call.1} parent=5 // pred_fallthru
        _
      %p166 = scmp.lt.s32.totalorder %s16, 6
      // Predicated region
      $region17: #{tpu_custom_call.1} parent=5 // pred_check
        %p167 = pneg %p166
      $region18: #{tpu_custom_call.1} parent=5 // pred_check_branch
        %169 = sbr.rel (%p167) target = $region20
      $region19: #{tpu_custom_call.1} parent=5 // pred_region
        // Predicated region
        $region21: #{tpu_custom_call.1} parent=19 // pred_check
          %p170 = pneg %p74
        $region22: #{tpu_custom_call.1} parent=19 // pred_check_branch
          %172 = sbr.rel (%p170) target = $region24
        $region23: #{tpu_custom_call.1} parent=19 // pred_region
          %s173 = sand.u32 %s16, 1
          %s174 = scalar_lea.sflag [#allocation6], %s173
          %s175 = sand.u32 %s64, 1
          %s176 = smul.addr %s175, 1536
          %s177 = scalar_lea.vmem [#allocation5], %s176
          %s178 = smul.u32 4, %s24
          %s180 = ssub.s32 24576, 24576
          %181 = vsyncadd %s174, %s180
          %s182 = smul.addr %s178, 64
          %s183 = scalar_lea.hbm %s1, %s182
          %s184 = sshll.u32 %s177, 4
          %s185 = int_to_ptr.vmem [resolvable:$true] %s184
          %190 = dma.hbm_to_vmem [thread:$0]  %s183, 24576, %s185, %s174, 1536, 256, 16
        $region24: #{tpu_custom_call.1} parent=19 // pred_fallthru
          _
        // Predicated region
        $region25: #{tpu_custom_call.1} parent=19 // pred_check
          %p191 = pneg %p100
        $region26: #{tpu_custom_call.1} parent=19 // pred_check_branch
          %193 = sbr.rel (%p191) target = $region28
        $region27: #{tpu_custom_call.1} parent=19 // pred_region
          %s194 = sand.u32 %s16, 1
          %s195 = scalar_lea.sflag [#allocation6], %s194
          %s196 = sand.u32 %s90, 1
          %s197 = smul.addr %s196, 4
          %s198 = scalar_lea.vmem [#allocation7], %s197
          %s199 = smul.u32 4, %s24
          %s201 = ssub.s32 64, 64
          %202 = vsyncadd %s195, %s201
          %s203 = smul.addr %s199, 16
          %s204 = scalar_lea.hbm %s2, %s203
          %s206 = sshll.u32 %s198, 4
          %s207 = int_to_ptr.vmem [resolvable:$true] %s206
          %209 = dma.hbm_to_vmem [thread:$0]  %s204, 64, %s207, %s195
        $region28: #{tpu_custom_call.1} parent=19 // pred_fallthru
          _
      $region20: #{tpu_custom_call.1} parent=5 // pred_fallthru
        _
      %p210 = scmp.le.s32.totalorder 1, %s16
      %p211 = scmp.lt.s32.totalorder %s16, 7
      %p212 = pnand %p210, %p211
      %p213 = pneg %p212
      // Predicated region
      $region29: #{tpu_custom_call.1} parent=5 // pred_check
        _
      $region30: #{tpu_custom_call.1} parent=5 // pred_check_branch
        %215 = sbr.rel (%p212) target = $region32
      $region31: #{tpu_custom_call.1} parent=5 // pred_region
        %s216 = ssub.s32 %s16, 1
        // Predicated region
        $region33: #{tpu_custom_call.1} parent=31 // pred_check
          %p217 = pneg %p54
        $region34: #{tpu_custom_call.1} parent=31 // pred_check_branch
          %219 = sbr.rel (%p217) target = $region36
        $region35: #{tpu_custom_call.1} parent=31 // pred_region
          %220 = dma.done [#allocation3], 1536
        $region36: #{tpu_custom_call.1} parent=31 // pred_fallthru
          _
        %s221 = sand.u32 %s21, 1
        %s222 = scalar_lea.sflag [#allocation6], %s221
        %s223 = sand.u32 %s67, 1
        %s224 = smul.addr %s223, 1536
        %s225 = scalar_lea.vmem [#allocation5], %s224
        // Predicated region
        $region37: #{tpu_custom_call.1} parent=31 // pred_check
          %p226 = pneg %p80
        $region38: #{tpu_custom_call.1} parent=31 // pred_check_branch
          %228 = sbr.rel (%p226) target = $region40
        $region39: #{tpu_custom_call.1} parent=31 // pred_region
          %229 = dma.done %s222, 24576
        $region40: #{tpu_custom_call.1} parent=31 // pred_fallthru
          _
        %s230 = sand.u32 %s21, 1
        %s231 = scalar_lea.sflag [#allocation6], %s230
        %s232 = sand.u32 %s93, 1
        %s233 = smul.addr %s232, 4
        %s234 = scalar_lea.vmem [#allocation7], %s233
        // Predicated region
        $region41: #{tpu_custom_call.1} parent=31 // pred_check
          %p235 = pneg %p106
        $region42: #{tpu_custom_call.1} parent=31 // pred_check_branch
          %237 = sbr.rel (%p235) target = $region44
        $region43: #{tpu_custom_call.1} parent=31 // pred_region
          %238 = dma.done %s231, 64
        $region44: #{tpu_custom_call.1} parent=31 // pred_fallthru
          _
        %p239 = pneg %p54
        %p240 = pneg %p51
        %s241 = sand.u32 %s21, 1
        %s242 = scalar_lea.sflag [#allocation6], %s241
        %s243 = sand.u32 %s67, 1
        %s244 = smul.addr %s243, 1536
        %s245 = scalar_lea.vmem [#allocation5], %s244
        %p246 = pneg %p80
        %p247 = pneg %p77
        %s248 = sand.u32 %s21, 1
        %s249 = scalar_lea.sflag [#allocation6], %s248
        %s250 = sand.u32 %s93, 1
        %s251 = smul.addr %s250, 4
        %s252 = scalar_lea.vmem [#allocation7], %s251
        %p253 = pneg %p106
        %p254 = pneg %p103
        %p255 = pneg %p134
        %p256 = pneg %p131
        %s257 = sand.u32 %s121, 1
        %s258 = scalar_lea.sflag [#allocation4], %s257
        %s259 = sand.u32 %s121, 1
        %s260 = smul.addr %s259, 64
        %s261 = scalar_lea.vmem [#allocation8], %s260
        %s262 = smul.u32 4, %s25
        %s263 = smul.u32 4, %s26
        %s264 = smul.u32 4, %s26
        %s265 = smul.u32 4, %s25
        %s266 = smul.u32 4, %s26
        %v267 = vld [vmem:[#allocation2] sm:$0xff]
        %v268 = vld [vmem:[#allocation2 + $0x8] sm:$0xff]
        %v269 = vld [vmem:[#allocation2 + $0x10] sm:$0xff]
        %v270 = vld [vmem:[#allocation2 + $0x18] sm:$0xff]
        %v271 = vld [vmem:[#allocation2 + $0x20] sm:$0xff]
        %v272 = vld [vmem:[#allocation2 + $0x28] sm:$0xff]
        %v273 = vld [vmem:[#allocation2 + $0x30] sm:$0xff]
        %v274 = vld [vmem:[#allocation2 + $0x38] sm:$0xff]
        %v275 = vld [vmem:[#allocation2 + $0x40] sm:$0xff]
        %v276 = vld [vmem:[#allocation2 + $0x48] sm:$0xff]
        %v277 = vld [vmem:[#allocation2 + $0x50] sm:$0xff]
        %v278 = vld [vmem:[#allocation2 + $0x58] sm:$0xff]
        %v279 = vld [vmem:[%s225] sm:$0xff]
        %v280 = vld [vmem:[%s225 + $0x8] sm:$0xff]
        %v281 = vld [vmem:[%s225 + $0x10] sm:$0xff]
        %v282 = vld [vmem:[%s225 + $0x18] sm:$0xff]
        %v283 = vld [vmem:[%s225 + $0x20] sm:$0xff]
        %v284 = vld [vmem:[%s225 + $0x28] sm:$0xff]
        %v285 = vld [vmem:[%s225 + $0x30] sm:$0xff]
        %v286 = vld [vmem:[%s225 + $0x38] sm:$0xff]
        %v287 = vld [vmem:[%s225 + $0x40] sm:$0xff]
        %v288 = vld [vmem:[%s225 + $0x48] sm:$0xff]
        %v289 = vld [vmem:[%s225 + $0x50] sm:$0xff]
        %v290 = vld [vmem:[%s225 + $0x58] sm:$0xff]
        %v291 = vld [vmem:[%s225 + $0x60] sm:$0xff]
        %v292 = vld [vmem:[%s225 + $0x68] sm:$0xff]
        %v293 = vld [vmem:[%s225 + $0x70] sm:$0xff]
        %v294 = vld [vmem:[%s225 + $0x78] sm:$0xff]
        %v295 = vld [vmem:[%s225 + $0x80] sm:$0xff]
        %v296 = vld [vmem:[%s225 + $0x88] sm:$0xff]
        %v297 = vld [vmem:[%s225 + $0x90] sm:$0xff]
        %v298 = vld [vmem:[%s225 + $0x98] sm:$0xff]
        %v299 = vld [vmem:[%s225 + $0xa0] sm:$0xff]
        %v300 = vld [vmem:[%s225 + $0xa8] sm:$0xff]
        %v301 = vld [vmem:[%s225 + $0xb0] sm:$0xff]
        %v302 = vld [vmem:[%s225 + $0xb8] sm:$0xff]
        %v303 = vld [vmem:[%s225 + $0xc0] sm:$0xff]
        %v304 = vld [vmem:[%s225 + $0xc8] sm:$0xff]
        %v305 = vld [vmem:[%s225 + $0xd0] sm:$0xff]
        %v306 = vld [vmem:[%s225 + $0xd8] sm:$0xff]
        %v307 = vld [vmem:[%s225 + $0xe0] sm:$0xff]
        %v308 = vld [vmem:[%s225 + $0xe8] sm:$0xff]
        %v309 = vld [vmem:[%s225 + $0xf0] sm:$0xff]
        %v310 = vld [vmem:[%s225 + $0xf8] sm:$0xff]
        %v311 = vld [vmem:[%s225 + $0x100] sm:$0xff]
        %v312 = vld [vmem:[%s225 + $0x108] sm:$0xff]
        %v313 = vld [vmem:[%s225 + $0x110] sm:$0xff]
        %v314 = vld [vmem:[%s225 + $0x118] sm:$0xff]
        %v315 = vld [vmem:[%s225 + $0x120] sm:$0xff]
        %v316 = vld [vmem:[%s225 + $0x128] sm:$0xff]
        %v317 = vld [vmem:[%s225 + $0x130] sm:$0xff]
        %v318 = vld [vmem:[%s225 + $0x138] sm:$0xff]
        %v319 = vld [vmem:[%s225 + $0x140] sm:$0xff]
        %v320 = vld [vmem:[%s225 + $0x148] sm:$0xff]
        %v321 = vld [vmem:[%s225 + $0x150] sm:$0xff]
        %v322 = vld [vmem:[%s225 + $0x158] sm:$0xff]
        %v323 = vld [vmem:[%s225 + $0x160] sm:$0xff]
        %v324 = vld [vmem:[%s225 + $0x168] sm:$0xff]
        %v325 = vld [vmem:[%s225 + $0x170] sm:$0xff]
        %v326 = vld [vmem:[%s225 + $0x178] sm:$0xff]
        %v327 = vld [vmem:[%s225 + $0x180] sm:$0xff]
        %v328 = vld [vmem:[%s225 + $0x188] sm:$0xff]
        %v329 = vld [vmem:[%s225 + $0x190] sm:$0xff]
        %v330 = vld [vmem:[%s225 + $0x198] sm:$0xff]
        %v331 = vld [vmem:[%s225 + $0x1a0] sm:$0xff]
        %v332 = vld [vmem:[%s225 + $0x1a8] sm:$0xff]
        %v333 = vld [vmem:[%s225 + $0x1b0] sm:$0xff]
        %v334 = vld [vmem:[%s225 + $0x1b8] sm:$0xff]
        %v335 = vld [vmem:[%s225 + $0x1c0] sm:$0xff]
        %v336 = vld [vmem:[%s225 + $0x1c8] sm:$0xff]
        %v337 = vld [vmem:[%s225 + $0x1d0] sm:$0xff]
        %v338 = vld [vmem:[%s225 + $0x1d8] sm:$0xff]
        %v339 = vld [vmem:[%s225 + $0x1e0] sm:$0xff]
        %v340 = vld [vmem:[%s225 + $0x1e8] sm:$0xff]
        %v341 = vld [vmem:[%s225 + $0x1f0] sm:$0xff]
        %v342 = vld [vmem:[%s225 + $0x1f8] sm:$0xff]
        %v343 = vld [vmem:[%s225 + $0x200] sm:$0xff]
        %v344 = vld [vmem:[%s225 + $0x208] sm:$0xff]
        %v345 = vld [vmem:[%s225 + $0x210] sm:$0xff]
        %v346 = vld [vmem:[%s225 + $0x218] sm:$0xff]
        %v347 = vld [vmem:[%s225 + $0x220] sm:$0xff]
        %v348 = vld [vmem:[%s225 + $0x228] sm:$0xff]
        %v349 = vld [vmem:[%s225 + $0x230] sm:$0xff]
        %v350 = vld [vmem:[%s225 + $0x238] sm:$0xff]
        %v351 = vld [vmem:[%s225 + $0x240] sm:$0xff]
        %v352 = vld [vmem:[%s225 + $0x248] sm:$0xff]
        %v353 = vld [vmem:[%s225 + $0x250] sm:$0xff]
        %v354 = vld [vmem:[%s225 + $0x258] sm:$0xff]
        %v355 = vld [vmem:[%s225 + $0x260] sm:$0xff]
        %v356 = vld [vmem:[%s225 + $0x268] sm:$0xff]
        %v357 = vld [vmem:[%s225 + $0x270] sm:$0xff]
        %v358 = vld [vmem:[%s225 + $0x278] sm:$0xff]
        %v359 = vld [vmem:[%s225 + $0x280] sm:$0xff]
        %v360 = vld [vmem:[%s225 + $0x288] sm:$0xff]
        %v361 = vld [vmem:[%s225 + $0x290] sm:$0xff]
        %v362 = vld [vmem:[%s225 + $0x298] sm:$0xff]
        %v363 = vld [vmem:[%s225 + $0x2a0] sm:$0xff]
        %v364 = vld [vmem:[%s225 + $0x2a8] sm:$0xff]
        %v365 = vld [vmem:[%s225 + $0x2b0] sm:$0xff]
        %v366 = vld [vmem:[%s225 + $0x2b8] sm:$0xff]
        %v367 = vld [vmem:[%s225 + $0x2c0] sm:$0xff]
        %v368 = vld [vmem:[%s225 + $0x2c8] sm:$0xff]
        %v369 = vld [vmem:[%s225 + $0x2d0] sm:$0xff]
        %v370 = vld [vmem:[%s225 + $0x2d8] sm:$0xff]
        %v371 = vld [vmem:[%s225 + $0x2e0] sm:$0xff]
        %v372 = vld [vmem:[%s225 + $0x2e8] sm:$0xff]
        %v373 = vld [vmem:[%s225 + $0x2f0] sm:$0xff]
        %v374 = vld [vmem:[%s225 + $0x2f8] sm:$0xff]
        %v375 = vld [vmem:[%s225 + $0x300] sm:$0xff]
        %v376 = vld [vmem:[%s225 + $0x308] sm:$0xff]
        %v377 = vld [vmem:[%s225 + $0x310] sm:$0xff]
        %v378 = vld [vmem:[%s225 + $0x318] sm:$0xff]
        %v379 = vld [vmem:[%s225 + $0x320] sm:$0xff]
        %v380 = vld [vmem:[%s225 + $0x328] sm:$0xff]
        %v381 = vld [vmem:[%s225 + $0x330] sm:$0xff]
        %v382 = vld [vmem:[%s225 + $0x338] sm:$0xff]
        %v383 = vld [vmem:[%s225 + $0x340] sm:$0xff]
        %v384 = vld [vmem:[%s225 + $0x348] sm:$0xff]
        %v385 = vld [vmem:[%s225 + $0x350] sm:$0xff]
        %v386 = vld [vmem:[%s225 + $0x358] sm:$0xff]
        %v387 = vld [vmem:[%s225 + $0x360] sm:$0xff]
        %v388 = vld [vmem:[%s225 + $0x368] sm:$0xff]
        %v389 = vld [vmem:[%s225 + $0x370] sm:$0xff]
        %v390 = vld [vmem:[%s225 + $0x378] sm:$0xff]
        %v391 = vld [vmem:[%s225 + $0x380] sm:$0xff]
        %v392 = vld [vmem:[%s225 + $0x388] sm:$0xff]
        %v393 = vld [vmem:[%s225 + $0x390] sm:$0xff]
        %v394 = vld [vmem:[%s225 + $0x398] sm:$0xff]
        %v395 = vld [vmem:[%s225 + $0x3a0] sm:$0xff]
        %v396 = vld [vmem:[%s225 + $0x3a8] sm:$0xff]
        %v397 = vld [vmem:[%s225 + $0x3b0] sm:$0xff]
        %v398 = vld [vmem:[%s225 + $0x3b8] sm:$0xff]
        %v399 = vld [vmem:[%s225 + $0x3c0] sm:$0xff]
        %v400 = vld [vmem:[%s225 + $0x3c8] sm:$0xff]
        %v401 = vld [vmem:[%s225 + $0x3d0] sm:$0xff]
        %v402 = vld [vmem:[%s225 + $0x3d8] sm:$0xff]
        %v403 = vld [vmem:[%s225 + $0x3e0] sm:$0xff]
        %v404 = vld [vmem:[%s225 + $0x3e8] sm:$0xff]
        %v405 = vld [vmem:[%s225 + $0x3f0] sm:$0xff]
        %v406 = vld [vmem:[%s225 + $0x3f8] sm:$0xff]
        %v407 = vld [vmem:[%s225 + $0x400] sm:$0xff]
        %v408 = vld [vmem:[%s225 + $0x408] sm:$0xff]
        %v409 = vld [vmem:[%s225 + $0x410] sm:$0xff]
        %v410 = vld [vmem:[%s225 + $0x418] sm:$0xff]
        %v411 = vld [vmem:[%s225 + $0x420] sm:$0xff]
        %v412 = vld [vmem:[%s225 + $0x428] sm:$0xff]
        %v413 = vld [vmem:[%s225 + $0x430] sm:$0xff]
        %v414 = vld [vmem:[%s225 + $0x438] sm:$0xff]
        %v415 = vld [vmem:[%s225 + $0x440] sm:$0xff]
        %v416 = vld [vmem:[%s225 + $0x448] sm:$0xff]
        %v417 = vld [vmem:[%s225 + $0x450] sm:$0xff]
        %v418 = vld [vmem:[%s225 + $0x458] sm:$0xff]
        %v419 = vld [vmem:[%s225 + $0x460] sm:$0xff]
        %v420 = vld [vmem:[%s225 + $0x468] sm:$0xff]
        %v421 = vld [vmem:[%s225 + $0x470] sm:$0xff]
        %v422 = vld [vmem:[%s225 + $0x478] sm:$0xff]
        %v423 = vld [vmem:[%s225 + $0x480] sm:$0xff]
        %v424 = vld [vmem:[%s225 + $0x488] sm:$0xff]
        %v425 = vld [vmem:[%s225 + $0x490] sm:$0xff]
        %v426 = vld [vmem:[%s225 + $0x498] sm:$0xff]
        %v427 = vld [vmem:[%s225 + $0x4a0] sm:$0xff]
        %v428 = vld [vmem:[%s225 + $0x4a8] sm:$0xff]
        %v429 = vld [vmem:[%s225 + $0x4b0] sm:$0xff]
        %v430 = vld [vmem:[%s225 + $0x4b8] sm:$0xff]
        %v431 = vld [vmem:[%s225 + $0x4c0] sm:$0xff]
        %v432 = vld [vmem:[%s225 + $0x4c8] sm:$0xff]
        %v433 = vld [vmem:[%s225 + $0x4d0] sm:$0xff]
        %v434 = vld [vmem:[%s225 + $0x4d8] sm:$0xff]
        %v435 = vld [vmem:[%s225 + $0x4e0] sm:$0xff]
        %v436 = vld [vmem:[%s225 + $0x4e8] sm:$0xff]
        %v437 = vld [vmem:[%s225 + $0x4f0] sm:$0xff]
        %v438 = vld [vmem:[%s225 + $0x4f8] sm:$0xff]
        %v439 = vld [vmem:[%s225 + $0x500] sm:$0xff]
        %v440 = vld [vmem:[%s225 + $0x508] sm:$0xff]
        %v441 = vld [vmem:[%s225 + $0x510] sm:$0xff]
        %v442 = vld [vmem:[%s225 + $0x518] sm:$0xff]
        %v443 = vld [vmem:[%s225 + $0x520] sm:$0xff]
        %v444 = vld [vmem:[%s225 + $0x528] sm:$0xff]
        %v445 = vld [vmem:[%s225 + $0x530] sm:$0xff]
        %v446 = vld [vmem:[%s225 + $0x538] sm:$0xff]
        %v447 = vld [vmem:[%s225 + $0x540] sm:$0xff]
        %v448 = vld [vmem:[%s225 + $0x548] sm:$0xff]
        %v449 = vld [vmem:[%s225 + $0x550] sm:$0xff]
        %v450 = vld [vmem:[%s225 + $0x558] sm:$0xff]
        %v451 = vld [vmem:[%s225 + $0x560] sm:$0xff]
        %v452 = vld [vmem:[%s225 + $0x568] sm:$0xff]
        %v453 = vld [vmem:[%s225 + $0x570] sm:$0xff]
        %v454 = vld [vmem:[%s225 + $0x578] sm:$0xff]
        %v455 = vld [vmem:[%s225 + $0x580] sm:$0xff]
        %v456 = vld [vmem:[%s225 + $0x588] sm:$0xff]
        %v457 = vld [vmem:[%s225 + $0x590] sm:$0xff]
        %v458 = vld [vmem:[%s225 + $0x598] sm:$0xff]
        %v459 = vld [vmem:[%s225 + $0x5a0] sm:$0xff]
        %v460 = vld [vmem:[%s225 + $0x5a8] sm:$0xff]
        %v461 = vld [vmem:[%s225 + $0x5b0] sm:$0xff]
        %v462 = vld [vmem:[%s225 + $0x5b8] sm:$0xff]
        %v463 = vld [vmem:[%s225 + $0x5c0] sm:$0xff]
        %v464 = vld [vmem:[%s225 + $0x5c8] sm:$0xff]
        %v465 = vld [vmem:[%s225 + $0x5d0] sm:$0xff]
        %v466 = vld [vmem:[%s225 + $0x5d8] sm:$0xff]
        %v467 = vld [vmem:[%s225 + $0x5e0] sm:$0xff]
        %v468 = vld [vmem:[%s225 + $0x5e8] sm:$0xff]
        %v469 = vld [vmem:[%s225 + $0x5f0] sm:$0xff]
        %v470 = vld [vmem:[%s225 + $0x5f8] sm:$0xff]
        %v471 = vld [vmem:[%s234] sm:$0xf]
        %v473 = vlaneseq
        %v474 = vshrl.u32 %v473, 7
        %v475 = vsub.s32 0, %v474
        %v476 = vrot.slane %v471, %v475
        %v477 = vlaneseq
        %v478 = vshrl.u32 %v477, 7
        %v479 = vsub.s32 1, %v478
        %v480 = vrot.slane %v471, %v479
        %v481 = vlaneseq
        %v482 = vshrl.u32 %v481, 7
        %v483 = vsub.s32 2, %v482
        %v484 = vrot.slane %v471, %v483
        %v485 = vlaneseq
        %v486 = vshrl.u32 %v485, 7
        %v487 = vsub.s32 3, %v486
        %v488 = vrot.slane %v471, %v487
        %v505 = vunpack.c.l.b16 %v267
        %v506 = vunpack.c.h.b16 %v267
        %v507 = vunpack.c.l.b16 %v268
        %v508 = vunpack.c.h.b16 %v268
        %v509 = vunpack.c.l.b16 %v269
        %v510 = vunpack.c.h.b16 %v269
        %v511 = vunpack.c.l.b16 %v270
        %v512 = vunpack.c.h.b16 %v270
        %v513 = vunpack.c.l.b16 %v271
        %v514 = vunpack.c.h.b16 %v271
        %v515 = vunpack.c.l.b16 %v272
        %v516 = vunpack.c.h.b16 %v272
        %v517 = vunpack.c.l.b16 %v273
        %v518 = vunpack.c.h.b16 %v273
        %v519 = vunpack.c.l.b16 %v274
        %v520 = vunpack.c.h.b16 %v274
        %v521 = vunpack.c.l.b16 %v275
        %v522 = vunpack.c.h.b16 %v275
        %v523 = vunpack.c.l.b16 %v276
        %v524 = vunpack.c.h.b16 %v276
        %v525 = vunpack.c.l.b16 %v277
        %v526 = vunpack.c.h.b16 %v277
        %v527 = vunpack.c.l.b16 %v278
        %v528 = vunpack.c.h.b16 %v278
        %v529 = vpack.c.b16 %v511, %v505
        %v530 = vpack.c.b16 %v512, %v506
        %v531 = vpack.c.b16 %v513, %v507
        %v532 = vpack.c.b16 %v514, %v508
        %v533 = vpack.c.b16 %v515, %v509
        %v534 = vpack.c.b16 %v516, %v510
        %v535 = vpack.c.b16 %v523, %v517
        %v536 = vpack.c.b16 %v524, %v518
        %v537 = vpack.c.b16 %v525, %v519
        %v538 = vpack.c.b16 %v526, %v520
        %v539 = vpack.c.b16 %v527, %v521
        %v540 = vpack.c.b16 %v528, %v522
        %v745 = vunpack.c.l.b16 %v279
        %v746 = vunpack.c.h.b16 %v279
        %v747 = vunpack.c.l.b16 %v280
        %v748 = vunpack.c.h.b16 %v280
        %v749 = vunpack.c.l.b16 %v281
        %v750 = vunpack.c.h.b16 %v281
        %v751 = vunpack.c.l.b16 %v282
        %v752 = vunpack.c.h.b16 %v282
        %v753 = vunpack.c.l.b16 %v283
        %v754 = vunpack.c.h.b16 %v283
        %v755 = vunpack.c.l.b16 %v284
        %v756 = vunpack.c.h.b16 %v284
        %v757 = vunpack.c.l.b16 %v285
        %v758 = vunpack.c.h.b16 %v285
        %v759 = vunpack.c.l.b16 %v286
        %v760 = vunpack.c.h.b16 %v286
        %v761 = vunpack.c.l.b16 %v287
        %v762 = vunpack.c.h.b16 %v287
        %v763 = vunpack.c.l.b16 %v288
        %v764 = vunpack.c.h.b16 %v288
        %v765 = vunpack.c.l.b16 %v289
        %v766 = vunpack.c.h.b16 %v289
        %v767 = vunpack.c.l.b16 %v290
        %v768 = vunpack.c.h.b16 %v290
        %v769 = vunpack.c.l.b16 %v291
        %v770 = vunpack.c.h.b16 %v291
        %v771 = vunpack.c.l.b16 %v292
        %v772 = vunpack.c.h.b16 %v292
        %v773 = vunpack.c.l.b16 %v293
        %v774 = vunpack.c.h.b16 %v293
        %v775 = vunpack.c.l.b16 %v294
        %v776 = vunpack.c.h.b16 %v294
        %v777 = vunpack.c.l.b16 %v295
        %v778 = vunpack.c.h.b16 %v295
        %v779 = vunpack.c.l.b16 %v296
        %v780 = vunpack.c.h.b16 %v296
        %v781 = vunpack.c.l.b16 %v297
        %v782 = vunpack.c.h.b16 %v297
        %v783 = vunpack.c.l.b16 %v298
        %v784 = vunpack.c.h.b16 %v298
        %v785 = vunpack.c.l.b16 %v299
        %v786 = vunpack.c.h.b16 %v299
        %v787 = vunpack.c.l.b16 %v300
        %v788 = vunpack.c.h.b16 %v300
        %v789 = vunpack.c.l.b16 %v301
        %v790 = vunpack.c.h.b16 %v301
        %v791 = vunpack.c.l.b16 %v302
        %v792 = vunpack.c.h.b16 %v302
        %v793 = vunpack.c.l.b16 %v303
        %v794 = vunpack.c.h.b16 %v303
        %v795 = vunpack.c.l.b16 %v304
        %v796 = vunpack.c.h.b16 %v304
        %v797 = vunpack.c.l.b16 %v305
        %v798 = vunpack.c.h.b16 %v305
        %v799 = vunpack.c.l.b16 %v306
        %v800 = vunpack.c.h.b16 %v306
        %v801 = vunpack.c.l.b16 %v307
        %v802 = vunpack.c.h.b16 %v307
        %v803 = vunpack.c.l.b16 %v308
        %v804 = vunpack.c.h.b16 %v308
        %v805 = vunpack.c.l.b16 %v309
        %v806 = vunpack.c.h.b16 %v309
        %v807 = vunpack.c.l.b16 %v310
        %v808 = vunpack.c.h.b16 %v310
        %v809 = vunpack.c.l.b16 %v311
        %v810 = vunpack.c.h.b16 %v311
        %v811 = vunpack.c.l.b16 %v312
        %v812 = vunpack.c.h.b16 %v312
        %v813 = vunpack.c.l.b16 %v313
        %v814 = vunpack.c.h.b16 %v313
        %v815 = vunpack.c.l.b16 %v314
        %v816 = vunpack.c.h.b16 %v314
        %v817 = vunpack.c.l.b16 %v315
        %v818 = vunpack.c.h.b16 %v315
        %v819 = vunpack.c.l.b16 %v316
        %v820 = vunpack.c.h.b16 %v316
        %v821 = vunpack.c.l.b16 %v317
        %v822 = vunpack.c.h.b16 %v317
        %v823 = vunpack.c.l.b16 %v318
        %v824 = vunpack.c.h.b16 %v318
        %v825 = vunpack.c.l.b16 %v319
        %v826 = vunpack.c.h.b16 %v319
        %v827 = vunpack.c.l.b16 %v320
        %v828 = vunpack.c.h.b16 %v320
        %v829 = vunpack.c.l.b16 %v321
        %v830 = vunpack.c.h.b16 %v321
        %v831 = vunpack.c.l.b16 %v322
        %v832 = vunpack.c.h.b16 %v322
        %v833 = vunpack.c.l.b16 %v323
        %v834 = vunpack.c.h.b16 %v323
        %v835 = vunpack.c.l.b16 %v324
        %v836 = vunpack.c.h.b16 %v324
        %v837 = vunpack.c.l.b16 %v325
        %v838 = vunpack.c.h.b16 %v325
        %v839 = vunpack.c.l.b16 %v326
        %v840 = vunpack.c.h.b16 %v326
        %v841 = vunpack.c.l.b16 %v327
        %v842 = vunpack.c.h.b16 %v327
        %v843 = vunpack.c.l.b16 %v328
        %v844 = vunpack.c.h.b16 %v328
        %v845 = vunpack.c.l.b16 %v329
        %v846 = vunpack.c.h.b16 %v329
        %v847 = vunpack.c.l.b16 %v330
        %v848 = vunpack.c.h.b16 %v330
        %v849 = vunpack.c.l.b16 %v331
        %v850 = vunpack.c.h.b16 %v331
        %v851 = vunpack.c.l.b16 %v332
        %v852 = vunpack.c.h.b16 %v332
        %v853 = vunpack.c.l.b16 %v333
        %v854 = vunpack.c.h.b16 %v333
        %v855 = vunpack.c.l.b16 %v334
        %v856 = vunpack.c.h.b16 %v334
        %v857 = vunpack.c.l.b16 %v335
        %v858 = vunpack.c.h.b16 %v335
        %v859 = vunpack.c.l.b16 %v336
        %v860 = vunpack.c.h.b16 %v336
        %v861 = vunpack.c.l.b16 %v337
        %v862 = vunpack.c.h.b16 %v337
        %v863 = vunpack.c.l.b16 %v338
        %v864 = vunpack.c.h.b16 %v338
        %v865 = vunpack.c.l.b16 %v339
        %v866 = vunpack.c.h.b16 %v339
        %v867 = vunpack.c.l.b16 %v340
        %v868 = vunpack.c.h.b16 %v340
        %v869 = vunpack.c.l.b16 %v341
        %v870 = vunpack.c.h.b16 %v341
        %v871 = vunpack.c.l.b16 %v342
        %v872 = vunpack.c.h.b16 %v342
        %v873 = vunpack.c.l.b16 %v343
        %v874 = vunpack.c.h.b16 %v343
        %v875 = vunpack.c.l.b16 %v344
        %v876 = vunpack.c.h.b16 %v344
        %v877 = vunpack.c.l.b16 %v345
        %v878 = vunpack.c.h.b16 %v345
        %v879 = vunpack.c.l.b16 %v346
        %v880 = vunpack.c.h.b16 %v346
        %v881 = vunpack.c.l.b16 %v347
        %v882 = vunpack.c.h.b16 %v347
        %v883 = vunpack.c.l.b16 %v348
        %v884 = vunpack.c.h.b16 %v348
        %v885 = vunpack.c.l.b16 %v349
        %v886 = vunpack.c.h.b16 %v349
        %v887 = vunpack.c.l.b16 %v350
        %v888 = vunpack.c.h.b16 %v350
        %v889 = vunpack.c.l.b16 %v351
        %v890 = vunpack.c.h.b16 %v351
        %v891 = vunpack.c.l.b16 %v352
        %v892 = vunpack.c.h.b16 %v352
        %v893 = vunpack.c.l.b16 %v353
        %v894 = vunpack.c.h.b16 %v353
        %v895 = vunpack.c.l.b16 %v354
        %v896 = vunpack.c.h.b16 %v354
        %v897 = vunpack.c.l.b16 %v355
        %v898 = vunpack.c.h.b16 %v355
        %v899 = vunpack.c.l.b16 %v356
        %v900 = vunpack.c.h.b16 %v356
        %v901 = vunpack.c.l.b16 %v357
        %v902 = vunpack.c.h.b16 %v357
        %v903 = vunpack.c.l.b16 %v358
        %v904 = vunpack.c.h.b16 %v358
        %v905 = vunpack.c.l.b16 %v359
        %v906 = vunpack.c.h.b16 %v359
        %v907 = vunpack.c.l.b16 %v360
        %v908 = vunpack.c.h.b16 %v360
        %v909 = vunpack.c.l.b16 %v361
        %v910 = vunpack.c.h.b16 %v361
        %v911 = vunpack.c.l.b16 %v362
        %v912 = vunpack.c.h.b16 %v362
        %v913 = vunpack.c.l.b16 %v363
        %v914 = vunpack.c.h.b16 %v363
        %v915 = vunpack.c.l.b16 %v364
        %v916 = vunpack.c.h.b16 %v364
        %v917 = vunpack.c.l.b16 %v365
        %v918 = vunpack.c.h.b16 %v365
        %v919 = vunpack.c.l.b16 %v366
        %v920 = vunpack.c.h.b16 %v366
        %v921 = vunpack.c.l.b16 %v367
        %v922 = vunpack.c.h.b16 %v367
        %v923 = vunpack.c.l.b16 %v368
        %v924 = vunpack.c.h.b16 %v368
        %v925 = vunpack.c.l.b16 %v369
        %v926 = vunpack.c.h.b16 %v369
        %v927 = vunpack.c.l.b16 %v370
        %v928 = vunpack.c.h.b16 %v370
        %v929 = vunpack.c.l.b16 %v371
        %v930 = vunpack.c.h.b16 %v371
        %v931 = vunpack.c.l.b16 %v372
        %v932 = vunpack.c.h.b16 %v372
        %v933 = vunpack.c.l.b16 %v373
        %v934 = vunpack.c.h.b16 %v373
        %v935 = vunpack.c.l.b16 %v374
        %v936 = vunpack.c.h.b16 %v374
        %v937 = vunpack.c.l.b16 %v375
        %v938 = vunpack.c.h.b16 %v375
        %v939 = vunpack.c.l.b16 %v376
        %v940 = vunpack.c.h.b16 %v376
        %v941 = vunpack.c.l.b16 %v377
        %v942 = vunpack.c.h.b16 %v377
        %v943 = vunpack.c.l.b16 %v378
        %v944 = vunpack.c.h.b16 %v378
        %v945 = vunpack.c.l.b16 %v379
        %v946 = vunpack.c.h.b16 %v379
        %v947 = vunpack.c.l.b16 %v380
        %v948 = vunpack.c.h.b16 %v380
        %v949 = vunpack.c.l.b16 %v381
        %v950 = vunpack.c.h.b16 %v381
        %v951 = vunpack.c.l.b16 %v382
        %v952 = vunpack.c.h.b16 %v382
        %v953 = vunpack.c.l.b16 %v383
        %v954 = vunpack.c.h.b16 %v383
        %v955 = vunpack.c.l.b16 %v384
        %v956 = vunpack.c.h.b16 %v384
        %v957 = vunpack.c.l.b16 %v385
        %v958 = vunpack.c.h.b16 %v385
        %v959 = vunpack.c.l.b16 %v386
        %v960 = vunpack.c.h.b16 %v386
        %v961 = vunpack.c.l.b16 %v387
        %v962 = vunpack.c.h.b16 %v387
        %v963 = vunpack.c.l.b16 %v388
        %v964 = vunpack.c.h.b16 %v388
        %v965 = vunpack.c.l.b16 %v389
        %v966 = vunpack.c.h.b16 %v389
        %v967 = vunpack.c.l.b16 %v390
        %v968 = vunpack.c.h.b16 %v390
        %v969 = vunpack.c.l.b16 %v391
        %v970 = vunpack.c.h.b16 %v391
        %v971 = vunpack.c.l.b16 %v392
        %v972 = vunpack.c.h.b16 %v392
        %v973 = vunpack.c.l.b16 %v393
        %v974 = vunpack.c.h.b16 %v393
        %v975 = vunpack.c.l.b16 %v394
        %v976 = vunpack.c.h.b16 %v394
        %v977 = vunpack.c.l.b16 %v395
        %v978 = vunpack.c.h.b16 %v395
        %v979 = vunpack.c.l.b16 %v396
        %v980 = vunpack.c.h.b16 %v396
        %v981 = vunpack.c.l.b16 %v397
        %v982 = vunpack.c.h.b16 %v397
        %v983 = vunpack.c.l.b16 %v398
        %v984 = vunpack.c.h.b16 %v398
        %v985 = vunpack.c.l.b16 %v399
        %v986 = vunpack.c.h.b16 %v399
        %v987 = vunpack.c.l.b16 %v400
        %v988 = vunpack.c.h.b16 %v400
        %v989 = vunpack.c.l.b16 %v401
        %v990 = vunpack.c.h.b16 %v401
        %v991 = vunpack.c.l.b16 %v402
        %v992 = vunpack.c.h.b16 %v402
        %v993 = vunpack.c.l.b16 %v403
        %v994 = vunpack.c.h.b16 %v403
        %v995 = vunpack.c.l.b16 %v404
        %v996 = vunpack.c.h.b16 %v404
        %v997 = vunpack.c.l.b16 %v405
        %v998 = vunpack.c.h.b16 %v405
        %v999 = vunpack.c.l.b16 %v406
        %v1000 = vunpack.c.h.b16 %v406
        %v1001 = vunpack.c.l.b16 %v407
        %v1002 = vunpack.c.h.b16 %v407
        %v1003 = vunpack.c.l.b16 %v408
        %v1004 = vunpack.c.h.b16 %v408
        %v1005 = vunpack.c.l.b16 %v409
        %v1006 = vunpack.c.h.b16 %v409
        %v1007 = vunpack.c.l.b16 %v410
        %v1008 = vunpack.c.h.b16 %v410
        %v1009 = vunpack.c.l.b16 %v411
        %v1010 = vunpack.c.h.b16 %v411
        %v1011 = vunpack.c.l.b16 %v412
        %v1012 = vunpack.c.h.b16 %v412
        %v1013 = vunpack.c.l.b16 %v413
        %v1014 = vunpack.c.h.b16 %v413
        %v1015 = vunpack.c.l.b16 %v414
        %v1016 = vunpack.c.h.b16 %v414
        %v1017 = vunpack.c.l.b16 %v415
        %v1018 = vunpack.c.h.b16 %v415
        %v1019 = vunpack.c.l.b16 %v416
        %v1020 = vunpack.c.h.b16 %v416
        %v1021 = vunpack.c.l.b16 %v417
        %v1022 = vunpack.c.h.b16 %v417
        %v1023 = vunpack.c.l.b16 %v418
        %v1024 = vunpack.c.h.b16 %v418
        %v1025 = vunpack.c.l.b16 %v419
        %v1026 = vunpack.c.h.b16 %v419
        %v1027 = vunpack.c.l.b16 %v420
        %v1028 = vunpack.c.h.b16 %v420
        %v1029 = vunpack.c.l.b16 %v421
        %v1030 = vunpack.c.h.b16 %v421
        %v1031 = vunpack.c.l.b16 %v422
        %v1032 = vunpack.c.h.b16 %v422
        %v1033 = vunpack.c.l.b16 %v423
        %v1034 = vunpack.c.h.b16 %v423
        %v1035 = vunpack.c.l.b16 %v424
        %v1036 = vunpack.c.h.b16 %v424
        %v1037 = vunpack.c.l.b16 %v425
        %v1038 = vunpack.c.h.b16 %v425
        %v1039 = vunpack.c.l.b16 %v426
        %v1040 = vunpack.c.h.b16 %v426
        %v1041 = vunpack.c.l.b16 %v427
        %v1042 = vunpack.c.h.b16 %v427
        %v1043 = vunpack.c.l.b16 %v428
        %v1044 = vunpack.c.h.b16 %v428
        %v1045 = vunpack.c.l.b16 %v429
        %v1046 = vunpack.c.h.b16 %v429
        %v1047 = vunpack.c.l.b16 %v430
        %v1048 = vunpack.c.h.b16 %v430
        %v1049 = vunpack.c.l.b16 %v431
        %v1050 = vunpack.c.h.b16 %v431
        %v1051 = vunpack.c.l.b16 %v432
        %v1052 = vunpack.c.h.b16 %v432
        %v1053 = vunpack.c.l.b16 %v433
        %v1054 = vunpack.c.h.b16 %v433
        %v1055 = vunpack.c.l.b16 %v434
        %v1056 = vunpack.c.h.b16 %v434
        %v1057 = vunpack.c.l.b16 %v435
        %v1058 = vunpack.c.h.b16 %v435
        %v1059 = vunpack.c.l.b16 %v436
        %v1060 = vunpack.c.h.b16 %v436
        %v1061 = vunpack.c.l.b16 %v437
        %v1062 = vunpack.c.h.b16 %v437
        %v1063 = vunpack.c.l.b16 %v438
        %v1064 = vunpack.c.h.b16 %v438
        %v1065 = vunpack.c.l.b16 %v439
        %v1066 = vunpack.c.h.b16 %v439
        %v1067 = vunpack.c.l.b16 %v440
        %v1068 = vunpack.c.h.b16 %v440
        %v1069 = vunpack.c.l.b16 %v441
        %v1070 = vunpack.c.h.b16 %v441
        %v1071 = vunpack.c.l.b16 %v442
        %v1072 = vunpack.c.h.b16 %v442
        %v1073 = vunpack.c.l.b16 %v443
        %v1074 = vunpack.c.h.b16 %v443
        %v1075 = vunpack.c.l.b16 %v444
        %v1076 = vunpack.c.h.b16 %v444
        %v1077 = vunpack.c.l.b16 %v445
        %v1078 = vunpack.c.h.b16 %v445
        %v1079 = vunpack.c.l.b16 %v446
        %v1080 = vunpack.c.h.b16 %v446
        %v1081 = vunpack.c.l.b16 %v447
        %v1082 = vunpack.c.h.b16 %v447
        %v1083 = vunpack.c.l.b16 %v448
        %v1084 = vunpack.c.h.b16 %v448
        %v1085 = vunpack.c.l.b16 %v449
        %v1086 = vunpack.c.h.b16 %v449
        %v1087 = vunpack.c.l.b16 %v450
        %v1088 = vunpack.c.h.b16 %v450
        %v1089 = vunpack.c.l.b16 %v451
        %v1090 = vunpack.c.h.b16 %v451
        %v1091 = vunpack.c.l.b16 %v452
        %v1092 = vunpack.c.h.b16 %v452
        %v1093 = vunpack.c.l.b16 %v453
        %v1094 = vunpack.c.h.b16 %v453
        %v1095 = vunpack.c.l.b16 %v454
        %v1096 = vunpack.c.h.b16 %v454
        %v1097 = vunpack.c.l.b16 %v455
        %v1098 = vunpack.c.h.b16 %v455
        %v1099 = vunpack.c.l.b16 %v456
        %v1100 = vunpack.c.h.b16 %v456
        %v1101 = vunpack.c.l.b16 %v457
        %v1102 = vunpack.c.h.b16 %v457
        %v1103 = vunpack.c.l.b16 %v458
        %v1104 = vunpack.c.h.b16 %v458
        %v1105 = vunpack.c.l.b16 %v459
        %v1106 = vunpack.c.h.b16 %v459
        %v1107 = vunpack.c.l.b16 %v460
        %v1108 = vunpack.c.h.b16 %v460
        %v1109 = vunpack.c.l.b16 %v461
        %v1110 = vunpack.c.h.b16 %v461
        %v1111 = vunpack.c.l.b16 %v462
        %v1112 = vunpack.c.h.b16 %v462
        %v1113 = vunpack.c.l.b16 %v463
        %v1114 = vunpack.c.h.b16 %v463
        %v1115 = vunpack.c.l.b16 %v464
        %v1116 = vunpack.c.h.b16 %v464
        %v1117 = vunpack.c.l.b16 %v465
        %v1118 = vunpack.c.h.b16 %v465
        %v1119 = vunpack.c.l.b16 %v466
        %v1120 = vunpack.c.h.b16 %v466
        %v1121 = vunpack.c.l.b16 %v467
        %v1122 = vunpack.c.h.b16 %v467
        %v1123 = vunpack.c.l.b16 %v468
        %v1124 = vunpack.c.h.b16 %v468
        %v1125 = vunpack.c.l.b16 %v469
        %v1126 = vunpack.c.h.b16 %v469
        %v1127 = vunpack.c.l.b16 %v470
        %v1128 = vunpack.c.h.b16 %v470
        %v1129 = vpack.c.b16 %v749, %v745
        %v1130 = vpack.c.b16 %v750, %v746
        %v1131 = vpack.c.b16 %v751, %v747
        %v1132 = vpack.c.b16 %v752, %v748
        %v1133 = vpack.c.b16 %v757, %v753
        %v1134 = vpack.c.b16 %v758, %v754
        %v1135 = vpack.c.b16 %v759, %v755
        %v1136 = vpack.c.b16 %v760, %v756
        %v1137 = vpack.c.b16 %v765, %v761
        %v1138 = vpack.c.b16 %v766, %v762
        %v1139 = vpack.c.b16 %v767, %v763
        %v1140 = vpack.c.b16 %v768, %v764
        %v1141 = vpack.c.b16 %v773, %v769
        %v1142 = vpack.c.b16 %v774, %v770
        %v1143 = vpack.c.b16 %v775, %v771
        %v1144 = vpack.c.b16 %v776, %v772
        %v1145 = vpack.c.b16 %v781, %v777
        %v1146 = vpack.c.b16 %v782, %v778
        %v1147 = vpack.c.b16 %v783, %v779
        %v1148 = vpack.c.b16 %v784, %v780
        %v1149 = vpack.c.b16 %v789, %v785
        %v1150 = vpack.c.b16 %v790, %v786
        %v1151 = vpack.c.b16 %v791, %v787
        %v1152 = vpack.c.b16 %v792, %v788
        %v1153 = vpack.c.b16 %v797, %v793
        %v1154 = vpack.c.b16 %v798, %v794
        %v1155 = vpack.c.b16 %v799, %v795
        %v1156 = vpack.c.b16 %v800, %v796
        %v1157 = vpack.c.b16 %v805, %v801
        %v1158 = vpack.c.b16 %v806, %v802
        %v1159 = vpack.c.b16 %v807, %v803
        %v1160 = vpack.c.b16 %v808, %v804
        %v1161 = vpack.c.b16 %v813, %v809
        %v1162 = vpack.c.b16 %v814, %v810
        %v1163 = vpack.c.b16 %v815, %v811
        %v1164 = vpack.c.b16 %v816, %v812
        %v1165 = vpack.c.b16 %v821, %v817
        %v1166 = vpack.c.b16 %v822, %v818
        %v1167 = vpack.c.b16 %v823, %v819
        %v1168 = vpack.c.b16 %v824, %v820
        %v1169 = vpack.c.b16 %v829, %v825
        %v1170 = vpack.c.b16 %v830, %v826
        %v1171 = vpack.c.b16 %v831, %v827
        %v1172 = vpack.c.b16 %v832, %v828
        %v1173 = vpack.c.b16 %v837, %v833
        %v1174 = vpack.c.b16 %v838, %v834
        %v1175 = vpack.c.b16 %v839, %v835
        %v1176 = vpack.c.b16 %v840, %v836
        %v1177 = vpack.c.b16 %v845, %v841
        %v1178 = vpack.c.b16 %v846, %v842
        %v1179 = vpack.c.b16 %v847, %v843
        %v1180 = vpack.c.b16 %v848, %v844
        %v1181 = vpack.c.b16 %v853, %v849
        %v1182 = vpack.c.b16 %v854, %v850
        %v1183 = vpack.c.b16 %v855, %v851
        %v1184 = vpack.c.b16 %v856, %v852
        %v1185 = vpack.c.b16 %v861, %v857
        %v1186 = vpack.c.b16 %v862, %v858
        %v1187 = vpack.c.b16 %v863, %v859
        %v1188 = vpack.c.b16 %v864, %v860
        %v1189 = vpack.c.b16 %v869, %v865
        %v1190 = vpack.c.b16 %v870, %v866
        %v1191 = vpack.c.b16 %v871, %v867
        %v1192 = vpack.c.b16 %v872, %v868
        %v1193 = vpack.c.b16 %v877, %v873
        %v1194 = vpack.c.b16 %v878, %v874
        %v1195 = vpack.c.b16 %v879, %v875
        %v1196 = vpack.c.b16 %v880, %v876
        %v1197 = vpack.c.b16 %v885, %v881
        %v1198 = vpack.c.b16 %v886, %v882
        %v1199 = vpack.c.b16 %v887, %v883
        %v1200 = vpack.c.b16 %v888, %v884
        %v1201 = vpack.c.b16 %v893, %v889
        %v1202 = vpack.c.b16 %v894, %v890
        %v1203 = vpack.c.b16 %v895, %v891
        %v1204 = vpack.c.b16 %v896, %v892
        %v1205 = vpack.c.b16 %v901, %v897
        %v1206 = vpack.c.b16 %v902, %v898
        %v1207 = vpack.c.b16 %v903, %v899
        %v1208 = vpack.c.b16 %v904, %v900
        %v1209 = vpack.c.b16 %v909, %v905
        %v1210 = vpack.c.b16 %v910, %v906
        %v1211 = vpack.c.b16 %v911, %v907
        %v1212 = vpack.c.b16 %v912, %v908
        %v1213 = vpack.c.b16 %v917, %v913
        %v1214 = vpack.c.b16 %v918, %v914
        %v1215 = vpack.c.b16 %v919, %v915
        %v1216 = vpack.c.b16 %v920, %v916
        %v1217 = vpack.c.b16 %v925, %v921
        %v1218 = vpack.c.b16 %v926, %v922
        %v1219 = vpack.c.b16 %v927, %v923
        %v1220 = vpack.c.b16 %v928, %v924
        %v1221 = vpack.c.b16 %v933, %v929
        %v1222 = vpack.c.b16 %v934, %v930
        %v1223 = vpack.c.b16 %v935, %v931
        %v1224 = vpack.c.b16 %v936, %v932
        %v1225 = vpack.c.b16 %v941, %v937
        %v1226 = vpack.c.b16 %v942, %v938
        %v1227 = vpack.c.b16 %v943, %v939
        %v1228 = vpack.c.b16 %v944, %v940
        %v1229 = vpack.c.b16 %v949, %v945
        %v1230 = vpack.c.b16 %v950, %v946
        %v1231 = vpack.c.b16 %v951, %v947
        %v1232 = vpack.c.b16 %v952, %v948
        %v1233 = vpack.c.b16 %v957, %v953
        %v1234 = vpack.c.b16 %v958, %v954
        %v1235 = vpack.c.b16 %v959, %v955
        %v1236 = vpack.c.b16 %v960, %v956
        %v1237 = vpack.c.b16 %v965, %v961
        %v1238 = vpack.c.b16 %v966, %v962
        %v1239 = vpack.c.b16 %v967, %v963
        %v1240 = vpack.c.b16 %v968, %v964
        %v1241 = vpack.c.b16 %v973, %v969
        %v1242 = vpack.c.b16 %v974, %v970
        %v1243 = vpack.c.b16 %v975, %v971
        %v1244 = vpack.c.b16 %v976, %v972
        %v1245 = vpack.c.b16 %v981, %v977
        %v1246 = vpack.c.b16 %v982, %v978
        %v1247 = vpack.c.b16 %v983, %v979
        %v1248 = vpack.c.b16 %v984, %v980
        %v1249 = vpack.c.b16 %v989, %v985
        %v1250 = vpack.c.b16 %v990, %v986
        %v1251 = vpack.c.b16 %v991, %v987
        %v1252 = vpack.c.b16 %v992, %v988
        %v1253 = vpack.c.b16 %v997, %v993
        %v1254 = vpack.c.b16 %v998, %v994
        %v1255 = vpack.c.b16 %v999, %v995
        %v1256 = vpack.c.b16 %v1000, %v996
        %v1257 = vpack.c.b16 %v1005, %v1001
        %v1258 = vpack.c.b16 %v1006, %v1002
        %v1259 = vpack.c.b16 %v1007, %v1003
        %v1260 = vpack.c.b16 %v1008, %v1004
        %v1261 = vpack.c.b16 %v1013, %v1009
        %v1262 = vpack.c.b16 %v1014, %v1010
        %v1263 = vpack.c.b16 %v1015, %v1011
        %v1264 = vpack.c.b16 %v1016, %v1012
        %v1265 = vpack.c.b16 %v1021, %v1017
        %v1266 = vpack.c.b16 %v1022, %v1018
        %v1267 = vpack.c.b16 %v1023, %v1019
        %v1268 = vpack.c.b16 %v1024, %v1020
        %v1269 = vpack.c.b16 %v1029, %v1025
        %v1270 = vpack.c.b16 %v1030, %v1026
        %v1271 = vpack.c.b16 %v1031, %v1027
        %v1272 = vpack.c.b16 %v1032, %v1028
        %v1273 = vpack.c.b16 %v1037, %v1033
        %v1274 = vpack.c.b16 %v1038, %v1034
        %v1275 = vpack.c.b16 %v1039, %v1035
        %v1276 = vpack.c.b16 %v1040, %v1036
        %v1277 = vpack.c.b16 %v1045, %v1041
        %v1278 = vpack.c.b16 %v1046, %v1042
        %v1279 = vpack.c.b16 %v1047, %v1043
        %v1280 = vpack.c.b16 %v1048, %v1044
        %v1281 = vpack.c.b16 %v1053, %v1049
        %v1282 = vpack.c.b16 %v1054, %v1050
        %v1283 = vpack.c.b16 %v1055, %v1051
        %v1284 = vpack.c.b16 %v1056, %v1052
        %v1285 = vpack.c.b16 %v1061, %v1057
        %v1286 = vpack.c.b16 %v1062, %v1058
        %v1287 = vpack.c.b16 %v1063, %v1059
        %v1288 = vpack.c.b16 %v1064, %v1060
        %v1289 = vpack.c.b16 %v1069, %v1065
        %v1290 = vpack.c.b16 %v1070, %v1066
        %v1291 = vpack.c.b16 %v1071, %v1067
        %v1292 = vpack.c.b16 %v1072, %v1068
        %v1293 = vpack.c.b16 %v1077, %v1073
        %v1294 = vpack.c.b16 %v1078, %v1074
        %v1295 = vpack.c.b16 %v1079, %v1075
        %v1296 = vpack.c.b16 %v1080, %v1076
        %v1297 = vpack.c.b16 %v1085, %v1081
        %v1298 = vpack.c.b16 %v1086, %v1082
        %v1299 = vpack.c.b16 %v1087, %v1083
        %v1300 = vpack.c.b16 %v1088, %v1084
        %v1301 = vpack.c.b16 %v1093, %v1089
        %v1302 = vpack.c.b16 %v1094, %v1090
        %v1303 = vpack.c.b16 %v1095, %v1091
        %v1304 = vpack.c.b16 %v1096, %v1092
        %v1305 = vpack.c.b16 %v1101, %v1097
        %v1306 = vpack.c.b16 %v1102, %v1098
        %v1307 = vpack.c.b16 %v1103, %v1099
        %v1308 = vpack.c.b16 %v1104, %v1100
        %v1309 = vpack.c.b16 %v1109, %v1105
        %v1310 = vpack.c.b16 %v1110, %v1106
        %v1311 = vpack.c.b16 %v1111, %v1107
        %v1312 = vpack.c.b16 %v1112, %v1108
        %v1313 = vpack.c.b16 %v1117, %v1113
        %v1314 = vpack.c.b16 %v1118, %v1114
        %v1315 = vpack.c.b16 %v1119, %v1115
        %v1316 = vpack.c.b16 %v1120, %v1116
        %v1317 = vpack.c.b16 %v1125, %v1121
        %v1318 = vpack.c.b16 %v1126, %v1122
        %v1319 = vpack.c.b16 %v1127, %v1123
        %v1320 = vpack.c.b16 %v1128, %v1124
        %1513 = vmatprep.subr.bf16.mxu0 %v1158
        %1514 = vmatpush1.bf16.msra.mxu0 %v1157
        %1515 = vmatprep.subr.bf16.mxu0 %v1154
        %1516 = vmatpush1.bf16.msra.mxu0 %v1153
        %1517 = vmatprep.subr.bf16.mxu0 %v1150
        %1518 = vmatpush1.bf16.msra.mxu0 %v1149
        %1519 = vmatprep.subr.bf16.mxu0 %v1146
        %1520 = vmatpush1.bf16.msra.mxu0 %v1145
        %1521 = vmatprep.subr.bf16.mxu0 %v1142
        %1522 = vmatpush1.bf16.msra.mxu0 %v1141
        %1523 = vmatprep.subr.bf16.mxu0 %v1138
        %1524 = vmatpush1.bf16.msra.mxu0 %v1137
        %1525 = vmatprep.subr.bf16.mxu0 %v1134
        %1526 = vmatpush1.bf16.msra.mxu0 %v1133
        %1527 = vmatprep.subr.bf16.mxu0 %v1130
        %1528 = vmatpush1.bf16.msra.mxu0 %v1129
        %1529 = vmatprep.subr.bf16.mxu0 %v1190
        %1530 = vmatpush2.bf16.msra.mxu0 %v1189
        %1531 = vmatprep.subr.bf16.mxu0 %v1186
        %1532 = vmatpush2.bf16.msra.mxu0 %v1185
        %1533 = vmatprep.subr.bf16.mxu0 %v1182
        %1534 = vmatpush2.bf16.msra.mxu0 %v1181
        %1535 = vmatprep.subr.bf16.mxu0 %v1178
        %1536 = vmatpush2.bf16.msra.mxu0 %v1177
        %1537 = vmatprep.subr.bf16.mxu0 %v1174
        %1538 = vmatpush2.bf16.msra.mxu0 %v1173
        %1539 = vmatprep.subr.bf16.mxu0 %v1170
        %1540 = vmatpush2.bf16.msra.mxu0 %v1169
        %1541 = vmatprep.subr.bf16.mxu0 %v1166
        %1542 = vmatpush2.bf16.msra.mxu0 %v1165
        %1543 = vmatprep.subr.bf16.mxu0 %v1162
        %1544 = vmatpush2.bf16.msra.mxu0 %v1161
        %1545 = vmatprep.mubr.bf16.mxu0 %v530
        %1546 = vmatmul.mubr.bf16.gmra.mxu0 %v529
        %v1547 = vpop.f32.mrf.mxu0
        %v1548 = vadd.f32 %v476, %v1547
        %v1549 = vpop.f32.mrf.mxu0
        %v1550 = vadd.f32 %v480, %v1549
        %v1551 = vpop.f32.mrf.mxu0
        %v1552 = vadd.f32 %v476, %v1551
        %v1553 = vpop.f32.mrf.mxu0
        %v1554 = vadd.f32 %v480, %v1553
        %1555 = vmatprep.mubr.bf16.mxu0 %v536
        %1556 = vmatmul.mubr.bf16.gmra.mxu0 %v535
        %v1557 = vpop.f32.mrf.mxu0
        %v1558 = vadd.f32 %v476, %v1557
        %v1559 = vpop.f32.mrf.mxu0
        %v1560 = vadd.f32 %v480, %v1559
        %v1561 = vpop.f32.mrf.mxu0
        %v1562 = vadd.f32 %v476, %v1561
        %v1563 = vpop.f32.mrf.mxu0
        %v1564 = vadd.f32 %v480, %v1563
        %1565 = vdwg.mxu0
        %1566 = vmatprep.subr.bf16.mxu0 %v1222
        %1567 = vmatpush1.bf16.msra.mxu0 %v1221
        %1568 = vmatprep.subr.bf16.mxu0 %v1218
        %1569 = vmatpush1.bf16.msra.mxu0 %v1217
        %1570 = vmatprep.subr.bf16.mxu0 %v1214
        %1571 = vmatpush1.bf16.msra.mxu0 %v1213
        %1572 = vmatprep.subr.bf16.mxu0 %v1210
        %1573 = vmatpush1.bf16.msra.mxu0 %v1209
        %1574 = vmatprep.subr.bf16.mxu0 %v1206
        %1575 = vmatpush1.bf16.msra.mxu0 %v1205
        %1576 = vmatprep.subr.bf16.mxu0 %v1202
        %1577 = vmatpush1.bf16.msra.mxu0 %v1201
        %1578 = vmatprep.subr.bf16.mxu0 %v1198
        %1579 = vmatpush1.bf16.msra.mxu0 %v1197
        %1580 = vmatprep.subr.bf16.mxu0 %v1194
        %1581 = vmatpush1.bf16.msra.mxu0 %v1193
        %1582 = vmatprep.subr.bf16.mxu0 %v1254
        %1583 = vmatpush2.bf16.msra.mxu0 %v1253
        %1584 = vmatprep.subr.bf16.mxu0 %v1250
        %1585 = vmatpush2.bf16.msra.mxu0 %v1249
        %1586 = vmatprep.subr.bf16.mxu0 %v1246
        %1587 = vmatpush2.bf16.msra.mxu0 %v1245
        %1588 = vmatprep.subr.bf16.mxu0 %v1242
        %1589 = vmatpush2.bf16.msra.mxu0 %v1241
        %1590 = vmatprep.subr.bf16.mxu0 %v1238
        %1591 = vmatpush2.bf16.msra.mxu0 %v1237
        %1592 = vmatprep.subr.bf16.mxu0 %v1234
        %1593 = vmatpush2.bf16.msra.mxu0 %v1233
        %1594 = vmatprep.subr.bf16.mxu0 %v1230
        %1595 = vmatpush2.bf16.msra.mxu0 %v1229
        %1596 = vmatprep.subr.bf16.mxu0 %v1226
        %1597 = vmatpush2.bf16.msra.mxu0 %v1225
        %1598 = vmatprep.mubr.bf16.mxu0 %v532
        %1599 = vmatmul.mubr.bf16.gmra.mxu0 %v531
        %v1600 = vpop.f32.mrf.mxu0
        %v1601 = vadd.f32 %v1548, %v1600
        %v1602 = vpop.f32.mrf.mxu0
        %v1603 = vadd.f32 %v1550, %v1602
        %v1604 = vpop.f32.mrf.mxu0
        %v1605 = vadd.f32 %v1552, %v1604
        %v1606 = vpop.f32.mrf.mxu0
        %v1607 = vadd.f32 %v1554, %v1606
        %1608 = vmatprep.mubr.bf16.mxu0 %v538
        %1609 = vmatmul.mubr.bf16.gmra.mxu0 %v537
        %v1610 = vpop.f32.mrf.mxu0
        %v1611 = vadd.f32 %v1558, %v1610
        %v1612 = vpop.f32.mrf.mxu0
        %v1613 = vadd.f32 %v1560, %v1612
        %v1614 = vpop.f32.mrf.mxu0
        %v1615 = vadd.f32 %v1562, %v1614
        %v1616 = vpop.f32.mrf.mxu0
        %v1617 = vadd.f32 %v1564, %v1616
        %1618 = vdwg.mxu0
        %1619 = vmatprep.subr.bf16.mxu0 %v1286
        %1620 = vmatpush1.bf16.msra.mxu0 %v1285
        %1621 = vmatprep.subr.bf16.mxu0 %v1282
        %1622 = vmatpush1.bf16.msra.mxu0 %v1281
        %1623 = vmatprep.subr.bf16.mxu0 %v1278
        %1624 = vmatpush1.bf16.msra.mxu0 %v1277
        %1625 = vmatprep.subr.bf16.mxu0 %v1274
        %1626 = vmatpush1.bf16.msra.mxu0 %v1273
        %1627 = vmatprep.subr.bf16.mxu0 %v1270
        %1628 = vmatpush1.bf16.msra.mxu0 %v1269
        %1629 = vmatprep.subr.bf16.mxu0 %v1266
        %1630 = vmatpush1.bf16.msra.mxu0 %v1265
        %1631 = vmatprep.subr.bf16.mxu0 %v1262
        %1632 = vmatpush1.bf16.msra.mxu0 %v1261
        %1633 = vmatprep.subr.bf16.mxu0 %v1258
        %1634 = vmatpush1.bf16.msra.mxu0 %v1257
        %1635 = vmatprep.subr.bf16.mxu0 %v1318
        %1636 = vmatpush2.bf16.msra.mxu0 %v1317
        %1637 = vmatprep.subr.bf16.mxu0 %v1314
        %1638 = vmatpush2.bf16.msra.mxu0 %v1313
        %1639 = vmatprep.subr.bf16.mxu0 %v1310
        %1640 = vmatpush2.bf16.msra.mxu0 %v1309
        %1641 = vmatprep.subr.bf16.mxu0 %v1306
        %1642 = vmatpush2.bf16.msra.mxu0 %v1305
        %1643 = vmatprep.subr.bf16.mxu0 %v1302
        %1644 = vmatpush2.bf16.msra.mxu0 %v1301
        %1645 = vmatprep.subr.bf16.mxu0 %v1298
        %1646 = vmatpush2.bf16.msra.mxu0 %v1297
        %1647 = vmatprep.subr.bf16.mxu0 %v1294
        %1648 = vmatpush2.bf16.msra.mxu0 %v1293
        %1649 = vmatprep.subr.bf16.mxu0 %v1290
        %1650 = vmatpush2.bf16.msra.mxu0 %v1289
        %1651 = vmatprep.mubr.bf16.mxu0 %v534
        %1652 = vmatmul.mubr.bf16.gmra.mxu0 %v533
        %v1653 = vpop.f32.mrf.mxu0
        %v1654 = vadd.f32 %v1601, %v1653
        %v1655 = vpop.f32.mrf.mxu0
        %v1656 = vadd.f32 %v1603, %v1655
        %v1657 = vpop.f32.mrf.mxu0
        %v1658 = vadd.f32 %v1605, %v1657
        %v1659 = vpop.f32.mrf.mxu0
        %v1660 = vadd.f32 %v1607, %v1659
        %1661 = vmatprep.mubr.bf16.mxu0 %v540
        %1662 = vmatmul.mubr.bf16.gmra.mxu0 %v539
        %v1663 = vpop.f32.mrf.mxu0
        %v1664 = vadd.f32 %v1611, %v1663
        %v1665 = vpop.f32.mrf.mxu0
        %v1666 = vadd.f32 %v1613, %v1665
        %v1667 = vpop.f32.mrf.mxu0
        %v1668 = vadd.f32 %v1615, %v1667
        %v1669 = vpop.f32.mrf.mxu0
        %v1670 = vadd.f32 %v1617, %v1669
        %1671 = vdwg.mxu0
        %1672 = vmatprep.subr.bf16.mxu0 %v1160
        %1673 = vmatpush1.bf16.msra.mxu0 %v1159
        %1674 = vmatprep.subr.bf16.mxu0 %v1156
        %1675 = vmatpush1.bf16.msra.mxu0 %v1155
        %1676 = vmatprep.subr.bf16.mxu0 %v1152
        %1677 = vmatpush1.bf16.msra.mxu0 %v1151
        %1678 = vmatprep.subr.bf16.mxu0 %v1148
        %1679 = vmatpush1.bf16.msra.mxu0 %v1147
        %1680 = vmatprep.subr.bf16.mxu0 %v1144
        %1681 = vmatpush1.bf16.msra.mxu0 %v1143
        %1682 = vmatprep.subr.bf16.mxu0 %v1140
        %1683 = vmatpush1.bf16.msra.mxu0 %v1139
        %1684 = vmatprep.subr.bf16.mxu0 %v1136
        %1685 = vmatpush1.bf16.msra.mxu0 %v1135
        %1686 = vmatprep.subr.bf16.mxu0 %v1132
        %1687 = vmatpush1.bf16.msra.mxu0 %v1131
        %1688 = vmatprep.subr.bf16.mxu0 %v1192
        %1689 = vmatpush2.bf16.msra.mxu0 %v1191
        %1690 = vmatprep.subr.bf16.mxu0 %v1188
        %1691 = vmatpush2.bf16.msra.mxu0 %v1187
        %1692 = vmatprep.subr.bf16.mxu0 %v1184
        %1693 = vmatpush2.bf16.msra.mxu0 %v1183
        %1694 = vmatprep.subr.bf16.mxu0 %v1180
        %1695 = vmatpush2.bf16.msra.mxu0 %v1179
        %1696 = vmatprep.subr.bf16.mxu0 %v1176
        %1697 = vmatpush2.bf16.msra.mxu0 %v1175
        %1698 = vmatprep.subr.bf16.mxu0 %v1172
        %1699 = vmatpush2.bf16.msra.mxu0 %v1171
        %1700 = vmatprep.subr.bf16.mxu0 %v1168
        %1701 = vmatpush2.bf16.msra.mxu0 %v1167
        %1702 = vmatprep.subr.bf16.mxu0 %v1164
        %1703 = vmatpush2.bf16.msra.mxu0 %v1163
        %1704 = vmatprep.mubr.bf16.mxu0 %v530
        %1705 = vmatmul.mubr.bf16.gmra.mxu0 %v529
        %v1706 = vpop.f32.mrf.mxu0
        %v1707 = vadd.f32 %v484, %v1706
        %v1708 = vpop.f32.mrf.mxu0
        %v1709 = vadd.f32 %v488, %v1708
        %v1710 = vpop.f32.mrf.mxu0
        %v1711 = vadd.f32 %v484, %v1710
        %v1712 = vpop.f32.mrf.mxu0
        %v1713 = vadd.f32 %v488, %v1712
        %1714 = vmatprep.mubr.bf16.mxu0 %v536
        %1715 = vmatmul.mubr.bf16.gmra.mxu0 %v535
        %v1716 = vpop.f32.mrf.mxu0
        %v1717 = vadd.f32 %v484, %v1716
        %v1718 = vpop.f32.mrf.mxu0
        %v1719 = vadd.f32 %v488, %v1718
        %v1720 = vpop.f32.mrf.mxu0
        %v1721 = vadd.f32 %v484, %v1720
        %v1722 = vpop.f32.mrf.mxu0
        %v1723 = vadd.f32 %v488, %v1722
        %1724 = vdwg.mxu0
        %1725 = vmatprep.subr.bf16.mxu0 %v1224
        %1726 = vmatpush1.bf16.msra.mxu0 %v1223
        %1727 = vmatprep.subr.bf16.mxu0 %v1220
        %1728 = vmatpush1.bf16.msra.mxu0 %v1219
        %1729 = vmatprep.subr.bf16.mxu0 %v1216
        %1730 = vmatpush1.bf16.msra.mxu0 %v1215
        %1731 = vmatprep.subr.bf16.mxu0 %v1212
        %1732 = vmatpush1.bf16.msra.mxu0 %v1211
        %1733 = vmatprep.subr.bf16.mxu0 %v1208
        %1734 = vmatpush1.bf16.msra.mxu0 %v1207
        %1735 = vmatprep.subr.bf16.mxu0 %v1204
        %1736 = vmatpush1.bf16.msra.mxu0 %v1203
        %1737 = vmatprep.subr.bf16.mxu0 %v1200
        %1738 = vmatpush1.bf16.msra.mxu0 %v1199
        %1739 = vmatprep.subr.bf16.mxu0 %v1196
        %1740 = vmatpush1.bf16.msra.mxu0 %v1195
        %1741 = vmatprep.subr.bf16.mxu0 %v1256
        %1742 = vmatpush2.bf16.msra.mxu0 %v1255
        %1743 = vmatprep.subr.bf16.mxu0 %v1252
        %1744 = vmatpush2.bf16.msra.mxu0 %v1251
        %1745 = vmatprep.subr.bf16.mxu0 %v1248
        %1746 = vmatpush2.bf16.msra.mxu0 %v1247
        %1747 = vmatprep.subr.bf16.mxu0 %v1244
        %1748 = vmatpush2.bf16.msra.mxu0 %v1243
        %1749 = vmatprep.subr.bf16.mxu0 %v1240
        %1750 = vmatpush2.bf16.msra.mxu0 %v1239
        %1751 = vmatprep.subr.bf16.mxu0 %v1236
        %1752 = vmatpush2.bf16.msra.mxu0 %v1235
        %1753 = vmatprep.subr.bf16.mxu0 %v1232
        %1754 = vmatpush2.bf16.msra.mxu0 %v1231
        %1755 = vmatprep.subr.bf16.mxu0 %v1228
        %1756 = vmatpush2.bf16.msra.mxu0 %v1227
        %1757 = vmatprep.mubr.bf16.mxu0 %v532
        %1758 = vmatmul.mubr.bf16.gmra.mxu0 %v531
        %v1759 = vpop.f32.mrf.mxu0
        %v1760 = vadd.f32 %v1707, %v1759
        %v1761 = vpop.f32.mrf.mxu0
        %v1762 = vadd.f32 %v1709, %v1761
        %v1763 = vpop.f32.mrf.mxu0
        %v1764 = vadd.f32 %v1711, %v1763
        %v1765 = vpop.f32.mrf.mxu0
        %v1766 = vadd.f32 %v1713, %v1765
        %1767 = vmatprep.mubr.bf16.mxu0 %v538
        %1768 = vmatmul.mubr.bf16.gmra.mxu0 %v537
        %v1769 = vpop.f32.mrf.mxu0
        %v1770 = vadd.f32 %v1717, %v1769
        %v1771 = vpop.f32.mrf.mxu0
        %v1772 = vadd.f32 %v1719, %v1771
        %v1773 = vpop.f32.mrf.mxu0
        %v1774 = vadd.f32 %v1721, %v1773
        %v1775 = vpop.f32.mrf.mxu0
        %v1776 = vadd.f32 %v1723, %v1775
        %1777 = vdwg.mxu0
        %1778 = vmatprep.subr.bf16.mxu0 %v1288
        %1779 = vmatpush1.bf16.msra.mxu0 %v1287
        %1780 = vmatprep.subr.bf16.mxu0 %v1284
        %1781 = vmatpush1.bf16.msra.mxu0 %v1283
        %1782 = vmatprep.subr.bf16.mxu0 %v1280
        %1783 = vmatpush1.bf16.msra.mxu0 %v1279
        %1784 = vmatprep.subr.bf16.mxu0 %v1276
        %1785 = vmatpush1.bf16.msra.mxu0 %v1275
        %1786 = vmatprep.subr.bf16.mxu0 %v1272
        %1787 = vmatpush1.bf16.msra.mxu0 %v1271
        %1788 = vmatprep.subr.bf16.mxu0 %v1268
        %1789 = vmatpush1.bf16.msra.mxu0 %v1267
        %1790 = vmatprep.subr.bf16.mxu0 %v1264
        %1791 = vmatpush1.bf16.msra.mxu0 %v1263
        %1792 = vmatprep.subr.bf16.mxu0 %v1260
        %1793 = vmatpush1.bf16.msra.mxu0 %v1259
        %1794 = vmatprep.subr.bf16.mxu0 %v1320
        %1795 = vmatpush2.bf16.msra.mxu0 %v1319
        %1796 = vmatprep.subr.bf16.mxu0 %v1316
        %1797 = vmatpush2.bf16.msra.mxu0 %v1315
        %1798 = vmatprep.subr.bf16.mxu0 %v1312
        %1799 = vmatpush2.bf16.msra.mxu0 %v1311
        %1800 = vmatprep.subr.bf16.mxu0 %v1308
        %1801 = vmatpush2.bf16.msra.mxu0 %v1307
        %1802 = vmatprep.subr.bf16.mxu0 %v1304
        %1803 = vmatpush2.bf16.msra.mxu0 %v1303
        %1804 = vmatprep.subr.bf16.mxu0 %v1300
        %1805 = vmatpush2.bf16.msra.mxu0 %v1299
        %1806 = vmatprep.subr.bf16.mxu0 %v1296
        %1807 = vmatpush2.bf16.msra.mxu0 %v1295
        %1808 = vmatprep.subr.bf16.mxu0 %v1292
        %1809 = vmatpush2.bf16.msra.mxu0 %v1291
        %1810 = vmatprep.mubr.bf16.mxu0 %v534
        %1811 = vmatmul.mubr.bf16.gmra.mxu0 %v533
        %v1812 = vpop.f32.mrf.mxu0
        %v1813 = vadd.f32 %v1760, %v1812
        %v1814 = vpop.f32.mrf.mxu0
        %v1815 = vadd.f32 %v1762, %v1814
        %v1816 = vpop.f32.mrf.mxu0
        %v1817 = vadd.f32 %v1764, %v1816
        %v1818 = vpop.f32.mrf.mxu0
        %v1819 = vadd.f32 %v1766, %v1818
        %1820 = vmatprep.mubr.bf16.mxu0 %v540
        %1821 = vmatmul.mubr.bf16.gmra.mxu0 %v539
        %v1822 = vpop.f32.mrf.mxu0
        %v1823 = vadd.f32 %v1770, %v1822
        %v1824 = vpop.f32.mrf.mxu0
        %v1825 = vadd.f32 %v1772, %v1824
        %v1826 = vpop.f32.mrf.mxu0
        %v1827 = vadd.f32 %v1774, %v1826
        %v1828 = vpop.f32.mrf.mxu0
        %v1829 = vadd.f32 %v1776, %v1828
        %1830 = vdwg.mxu0
        %v1831 = vpack.c.bf16 %v1658, %v1654
        %v1832 = vpack.c.bf16 %v1660, %v1656
        %v1833 = vpack.c.bf16 %v1817, %v1813
        %v1834 = vpack.c.bf16 %v1819, %v1815
        %v1835 = vpack.c.bf16 %v1668, %v1664
        %v1836 = vpack.c.bf16 %v1670, %v1666
        %v1837 = vpack.c.bf16 %v1827, %v1823
        %v1838 = vpack.c.bf16 %v1829, %v1825
        %v1847 = vunpack.c.l.b16 %v1831
        %v1848 = vunpack.c.l.b16 %v1832
        %v1849 = vunpack.c.l.b16 %v1833
        %v1850 = vunpack.c.l.b16 %v1834
        %v1851 = vunpack.c.h.b16 %v1831
        %v1852 = vunpack.c.h.b16 %v1832
        %v1853 = vunpack.c.h.b16 %v1833
        %v1854 = vunpack.c.h.b16 %v1834
        %v1855 = vunpack.c.l.b16 %v1835
        %v1856 = vunpack.c.l.b16 %v1836
        %v1857 = vunpack.c.l.b16 %v1837
        %v1858 = vunpack.c.l.b16 %v1838
        %v1859 = vunpack.c.h.b16 %v1835
        %v1860 = vunpack.c.h.b16 %v1836
        %v1861 = vunpack.c.h.b16 %v1837
        %v1862 = vunpack.c.h.b16 %v1838
        %v1863 = vpack.c.b16 %v1848, %v1847
        %v1864 = vpack.c.b16 %v1850, %v1849
        %v1865 = vpack.c.b16 %v1852, %v1851
        %v1866 = vpack.c.b16 %v1854, %v1853
        %v1867 = vpack.c.b16 %v1856, %v1855
        %v1868 = vpack.c.b16 %v1858, %v1857
        %v1869 = vpack.c.b16 %v1860, %v1859
        %v1870 = vpack.c.b16 %v1862, %v1861
        %1879 = vst [vmem:[%s261] sm:$0xff] %v1863
        %1880 = vst [vmem:[%s261 + $0x8] sm:$0xff] %v1864
        %1881 = vst [vmem:[%s261 + $0x10] sm:$0xff] %v1865
        %1882 = vst [vmem:[%s261 + $0x18] sm:$0xff] %v1866
        %1883 = vst [vmem:[%s261 + $0x20] sm:$0xff] %v1867
        %1884 = vst [vmem:[%s261 + $0x28] sm:$0xff] %v1868
        %1885 = vst [vmem:[%s261 + $0x30] sm:$0xff] %v1869
        %1886 = vst [vmem:[%s261 + $0x38] sm:$0xff] %v1870
        %s1887 = sand.u32 %s121, 1
        %s1888 = scalar_lea.sflag [#allocation4], %s1887
        %s1889 = sand.u32 %s121, 1
        %s1890 = smul.addr %s1889, 64
        %s1891 = scalar_lea.vmem [#allocation8], %s1890
        // Predicated region
        $region45: #{tpu_custom_call.1} parent=31 // pred_check
          %p1892 = pneg %p131
        $region46: #{tpu_custom_call.1} parent=31 // pred_check_branch
          %1894 = sbr.rel (%p1892) target = $region48
        $region47: #{tpu_custom_call.1} parent=31 // pred_region
          %s1895 = smul.u32 4, %s25
          %s1896 = smul.u32 4, %s26
          %s1898 = ssub.s32 1024, 1024
          %1899 = vsyncadd %s1888, %s1898
          %s1900 = smul.addr %s1895, 24
          %s1901 = sadd.s32 %s1896, %s1900
          %s1902 = smul.addr %s1901, 64
          %s1903 = scalar_lea.hbm %s3, %s1902
          %s1904 = sshll.u32 %s1891, 4
          %s1905 = int_to_ptr.vmem [resolvable:$true] %s1904
          %1910 = dma.vmem_to_hbm [thread:$0]  %s1905, 1024, %s1903, %s1888, 256, 1536, 16
        $region48: #{tpu_custom_call.1} parent=31 // pred_fallthru
          _
      $region32: #{tpu_custom_call.1} parent=5 // pred_fallthru
        _
      %p1911 = scmp.le.s32.totalorder 2, %s16
      // Predicated region
      $region49: #{tpu_custom_call.1} parent=5 // pred_check
        %p1912 = pneg %p1911
      $region50: #{tpu_custom_call.1} parent=5 // pred_check_branch
        %1914 = sbr.rel (%p1912) target = $region52
      $region51: #{tpu_custom_call.1} parent=5 // pred_region
        %s1915 = ssub.s32 %s16, 2
        // Predicated region
        $region53: #{tpu_custom_call.1} parent=51 // pred_check
          %p1916 = pneg %p137
        $region54: #{tpu_custom_call.1} parent=51 // pred_check_branch
          %1918 = sbr.rel (%p1916) target = $region56
        $region55: #{tpu_custom_call.1} parent=51 // pred_region
          %s1919 = sand.u32 %s122, 1
          %s1920 = scalar_lea.sflag [#allocation4], %s1919
          %s1921 = sand.u32 %s122, 1
          %s1922 = smul.addr %s1921, 64
          %s1923 = scalar_lea.vmem [#allocation8], %s1922
          %1924 = dma.done %s1920, 1024
        $region56: #{tpu_custom_call.1} parent=51 // pred_fallthru
          _
      $region52: #{tpu_custom_call.1} parent=5 // pred_fallthru
        _
    $region6: #{tpu_custom_call.1} parent=1 // loop_footer
      %s20 = sadd.s32 1, %s16
    $region7: #{tpu_custom_call.1} parent=1 // loop_footer_branch
      %15 = sbr.rel target = $region3
    $region8: #{tpu_custom_call.1} parent=1 // loop_exit
      _
    %1925 = vsyncpa [#allocation3], 1
    %s1926 = scalar_lea.sflag [#allocation3], 1
    %1927 = vsyncpa %s1926, 1
    %1928 = vsyncpa [#allocation6], 1
    %s1929 = scalar_lea.sflag [#allocation6], 1
    %1930 = vsyncpa %s1929, 1
    %1931 = vsyncpa [#allocation4], 1
    %s1932 = scalar_lea.sflag [#allocation4], 1
    %1933 = vsyncpa %s1932, 1

</llo_original>
